<compile_context>
chip_gen: v5e
topology: v5e:2x2
jax: 0.10.0
libtpu: 0.0.40
codegen_flags: <defaults>
</compile_context>

<pallas_src>
import math

import jax
import jax.numpy as jnp
from jax.experimental import pallas as pl
from jax.experimental.pallas import tpu as pltpu

# ---- model dimensions (small, consistent with a BERT-style encoder) ----
B = 2            # batch (number of sentences)
S = 8            # sequence length
H = 32           # embedding_dim / hidden size
NUM_HEADS = 4
HEAD_DIM = H // NUM_HEADS
FFN = 64         # intermediate size
VOCAB = 100
MAX_POS = 16
N_LAYERS = 2
LN_EPS = 1e-12
BS = B * S


# ---------------- in-kernel math helpers (pure jnp on values) ----------------
def _layer_norm(x, gamma, beta):
    mean = jnp.mean(x, axis=-1, keepdims=True)
    var = jnp.mean((x - mean) ** 2, axis=-1, keepdims=True)
    inv = jax.lax.rsqrt(var + LN_EPS)
    return (x - mean) * inv * gamma + beta


def _softmax_last(s):
    m = jnp.max(s, axis=-1, keepdims=True)
    e = jnp.exp(s - m)
    denom = jnp.sum(e, axis=-1, keepdims=True)
    # divide moves to the otherwise-idle EUP slot
    return e * pl.reciprocal(denom, approx=True)


def _gelu(x):
    # TODO(synk): HF BERT uses exact erf-based GELU; tanh approximation used here.
    c = math.sqrt(2.0 / math.pi)
    return 0.5 * x * (1.0 + jnp.tanh(c * (x + 0.044715 * x * x * x)))


def _row(ref, l):
    """Load row l of an (L, dim) parameter as a lane-dense (1, dim) value."""
    return ref[pl.ds(l, 1), :]


# ------------------------------ Pallas kernel ---------------------------------
def encoder_kernel(ids_ref,                                   # scalar prefetch (SMEM)
                   mask_ref, word_emb_ref, pos_ref, type_ref,
                   emb_g_ref, emb_b_ref,
                   wqkv_ref, bqkv_ref, wo_ref, bo_ref, g1_ref, b1_ref,
                   wi_ref, bi_ref, wf_ref, bf_ref, g2_ref, b2_ref,
                   out_ref, emb_scratch):
    b = pl.program_id(0)                                      # sentence index

    # ---- in-kernel embedding gather: word + position + token-type(0) ----
    type_row = type_ref[pl.ds(0, 1), :]                       # (1, H)
    for s in range(S):                                        # static unroll
        tok = ids_ref[b * S + s]                              # scalar from SMEM
        wrow = word_emb_ref[pl.ds(tok, 1), :]                 # (1, H) dynamic row
        emb_scratch[pl.ds(s, 1), :] = wrow + pos_ref[pl.ds(s, 1), :] + type_row

    x = _layer_norm(emb_scratch[...], emb_g_ref[...], emb_b_ref[...])   # (S, H) f32

    # ---- per-sentence additive key-padding mask (block-diagonal implicit) ----
    keep = mask_ref[pl.ds(b, 1), :]                           # (1, S) f32
    neg = (1.0 - keep) * -1e9                                 # 0 = keep, -1e9 = mask
    scale = 1.0 / math.sqrt(HEAD_DIM)

    for l in range(N_LAYERS):            # static unroll; weights stay in VMEM
        # ---- fused QKV: ONE (S,H)@(H,3H) bf16 matmul, fp32 accumulate ----
        qkv = jnp.dot(x.astype(jnp.bfloat16), wqkv_ref[l],
                      preferred_element_type=jnp.float32) + _row(bqkv_ref, l)
        q = qkv[:, 0:H]                                       # (S, H)
        k = qkv[:, H:2 * H]
        v = qkv[:, 2 * H:3 * H]

        # head-major views via static lane slices (no value reshape/transpose)
        qh = jnp.stack([q[:, h * HEAD_DIM:(h + 1) * HEAD_DIM]
                        for h in range(NUM_HEADS)]).astype(jnp.bfloat16)  # (NH,S,Dh)
        kh = jnp.stack([k[:, h * HEAD_DIM:(h + 1) * HEAD_DIM]
                        for h in range(NUM_HEADS)]).astype(jnp.bfloat16)
        vh = jnp.stack([v[:, h * HEAD_DIM:(h + 1) * HEAD_DIM]
                        for h in range(NUM_HEADS)]).astype(jnp.bfloat16)

        # ---- batched multi-head attention with masked softmax ----
        scores = jnp.einsum("hqd,hkd->hqk", qh, kh,
                            preferred_element_type=jnp.float32) * scale
        scores = scores + neg[None, :, :]                     # (NH, S, S)
        p = _softmax_last(scores)
        ctx = jnp.einsum("hqk,hkd->hqd", p.astype(jnp.bfloat16), vh,
                         preferred_element_type=jnp.float32)  # (NH, S, Dh)

        # fold heads back into the lane axis: (S, NH*Dh) = (S, H)
        ctx2 = jnp.concatenate([ctx[h] for h in range(NUM_HEADS)], axis=-1)

        # ---- output projection: ONE (S,H)@(H,H) bf16 matmul ----
        attn = jnp.dot(ctx2.astype(jnp.bfloat16), wo_ref[l],
                       preferred_element_type=jnp.float32) + _row(bo_ref, l)
        x1 = _layer_norm(x + attn, _row(g1_ref, l), _row(b1_ref, l))

        # ---- feed-forward ----
        ff = jnp.dot(x1.astype(jnp.bfloat16), wi_ref[l],
                     preferred_element_type=jnp.float32) + _row(bi_ref, l)
        ff = _gelu(ff)
        ff = jnp.dot(ff.astype(jnp.bfloat16), wf_ref[l],
                     preferred_element_type=jnp.float32) + _row(bf_ref, l)
        x = _layer_norm(x1 + ff, _row(g2_ref, l), _row(b2_ref, l))

    # ---- emit only the CLS row of this sentence ----
    out_ref[0, :, :] = x[0:1, :]                              # (1, H)


# ------------------------------ Pallas wrapper ---------------------------------
def bert_encoder(ids_flat, mask_f, params):
    vm = pl.BlockSpec(memory_space=pltpu.MemorySpace.VMEM)    # whole-array resident
    grid_spec = pltpu.PrefetchScalarGridSpec(
        num_scalar_prefetch=1,                                # ids_flat -> SMEM
        grid=(B,),                                            # one sentence per step
        in_specs=[vm] * 18,
        out_specs=pl.BlockSpec((1, 1, H), lambda b, ids: (b, 0, 0)),
        scratch_shapes=[pltpu.VMEM((S, H), jnp.float32)],     # gathered embeddings
    )
    out = pl.pallas_call(
        encoder_kernel,
        out_shape=jax.ShapeDtypeStruct((B, 1, H), jnp.float32),
        grid_spec=grid_spec,
        compiler_params=pltpu.CompilerParams(
            dimension_semantics=("parallel",)),               # megacore on v7x
    )(ids_flat, mask_f,
      params["word_emb"], params["pos_emb"], params["type_emb"],
      params["emb_g"], params["emb_b"],
      params["w_qkv"], params["b_qkv"], params["wo"], params["bo"],
      params["g1"], params["b1"], params["wi"], params["bi"],
      params["wf"], params["bf"], params["g2"], params["b2"])
    return out.reshape(B, H)


# ---------------------------- parameter init ----------------------------------
def init_params(key):
    std = 0.02
    keys = iter(jax.random.split(key, 3 + 4 * N_LAYERS))

    def nrm(shape):
        return (std * jax.random.normal(next(keys), shape)).astype(jnp.float32)

    params = {
        "word_emb": nrm((VOCAB, H)),
        "pos_emb": nrm((MAX_POS, H)),
        "type_emb": nrm((2, H)),
        "emb_g": jnp.ones((1, H), jnp.float32),
        "emb_b": jnp.zeros((1, H), jnp.float32),
    }
    w_qkv, wo, wi, wf = [], [], [], []
    for _ in range(N_LAYERS):
        w_qkv.append(nrm((H, 3 * H)))                         # fused QKV weight
        wo.append(nrm((H, H)))                                # output projection
        wi.append(nrm((H, FFN)))
        wf.append(nrm((FFN, H)))
    params.update({
        # matmul weights stored bf16 (native MXU input); biases / LN params fp32
        "w_qkv": jnp.stack(w_qkv).astype(jnp.bfloat16),       # (L, H, 3H)
        "b_qkv": jnp.zeros((N_LAYERS, 3 * H), jnp.float32),
        "wo": jnp.stack(wo).astype(jnp.bfloat16),             # (L, H, H)
        "bo": jnp.zeros((N_LAYERS, H), jnp.float32),
        "g1": jnp.ones((N_LAYERS, H), jnp.float32),
        "b1": jnp.zeros((N_LAYERS, H), jnp.float32),
        "wi": jnp.stack(wi).astype(jnp.bfloat16),             # (L, H, FFN)
        "bi": jnp.zeros((N_LAYERS, FFN), jnp.float32),
        "wf": jnp.stack(wf).astype(jnp.bfloat16),             # (L, FFN, H)
        "bf": jnp.zeros((N_LAYERS, H), jnp.float32),
        "g2": jnp.ones((N_LAYERS, H), jnp.float32),
        "b2": jnp.zeros((N_LAYERS, H), jnp.float32),
    })
    return params


# ------------------------------ forward pass -----------------------------------
@jax.jit
def single_sentence_encoder_bert(input_ids, attention_mask, params):
    """Returns CLS embeddings of shape (batch, H), like last_hidden_state[:, 0]."""
    ids_flat = input_ids.reshape(BS).astype(jnp.int32)        # scalar-prefetch arg
    mask_f = attention_mask.astype(jnp.float32)               # (B, S) key-padding
    return bert_encoder(ids_flat, mask_f, params)


if __name__ == "__main__":
    key = jax.random.PRNGKey(0)
    pkey, ikey = jax.random.split(key)

    params = init_params(pkey)
    input_ids = jax.random.randint(ikey, (B, S), 0, VOCAB, dtype=jnp.int32)
    # sentence 0 fully valid; sentence 1 has 2 padding tokens at the end
    attention_mask = jnp.concatenate(
        [jnp.ones((B, S - 2), jnp.int32),
         jnp.array([[1, 1], [0, 0]], jnp.int32)], axis=1)

    cls = single_sentence_encoder_bert(input_ids, attention_mask, params)
    cls = jax.block_until_ready(cls)
    assert cls.shape == (B, H) and cls.dtype == jnp.float32
    assert bool(jnp.all(jnp.isfinite(cls)))
    print("KERNEL_OK")
</pallas_src>

<mosaic_0001>
module attributes {stable_mosaic.version = 11 : i64} {
  func.func @encoder_kernel(%arg0: i32, %arg1: memref<16xi32, #tpu.memory_space<smem>>, %arg2: memref<2x8xf32, #tpu.memory_space<vmem>>, %arg3: memref<100x32xf32, #tpu.memory_space<vmem>>, %arg4: memref<16x32xf32, #tpu.memory_space<vmem>>, %arg5: memref<2x32xf32, #tpu.memory_space<vmem>>, %arg6: memref<1x32xf32, #tpu.memory_space<vmem>>, %arg7: memref<1x32xf32, #tpu.memory_space<vmem>>, %arg8: memref<2x32x96xbf16, #tpu.memory_space<vmem>>, %arg9: memref<2x96xf32, #tpu.memory_space<vmem>>, %arg10: memref<2x32x32xbf16, #tpu.memory_space<vmem>>, %arg11: memref<2x32xf32, #tpu.memory_space<vmem>>, %arg12: memref<2x32xf32, #tpu.memory_space<vmem>>, %arg13: memref<2x32xf32, #tpu.memory_space<vmem>>, %arg14: memref<2x32x64xbf16, #tpu.memory_space<vmem>>, %arg15: memref<2x64xf32, #tpu.memory_space<vmem>>, %arg16: memref<2x64x32xbf16, #tpu.memory_space<vmem>>, %arg17: memref<2x32xf32, #tpu.memory_space<vmem>>, %arg18: memref<2x32xf32, #tpu.memory_space<vmem>>, %arg19: memref<2x32xf32, #tpu.memory_space<vmem>>, %arg20: memref<1x1x32xf32, #tpu.memory_space<vmem>>, %arg21: memref<8x32xf32, #tpu.memory_space<vmem>>) attributes {dimension_semantics = [#tpu.dimension_semantics<parallel>], iteration_bounds = array<i64: 2>, scalar_prefetch = 1 : i64, scratch_operands = 1 : i64, tpu.core_type = #tpu.core_type<tc>, window_params = [{pipeline_mode = #tpu.pipeline_mode<synchronous>, transform_indices = @transform_0, window_bounds = array<i64: 2, 8>}, {pipeline_mode = #tpu.pipeline_mode<synchronous>, transform_indices = @transform_1, window_bounds = array<i64: 100, 32>}, {pipeline_mode = #tpu.pipeline_mode<synchronous>, transform_indices = @transform_2, window_bounds = array<i64: 16, 32>}, {pipeline_mode = #tpu.pipeline_mode<synchronous>, transform_indices = @transform_3, window_bounds = array<i64: 2, 32>}, {pipeline_mode = #tpu.pipeline_mode<synchronous>, transform_indices = @transform_4, window_bounds = array<i64: 1, 32>}, {pipeline_mode = #tpu.pipeline_mode<synchronous>, transform_indices = @transform_5, window_bounds = array<i64: 1, 32>}, {pipeline_mode = #tpu.pipeline_mode<synchronous>, transform_indices = @transform_6, window_bounds = array<i64: 2, 32, 96>}, {pipeline_mode = #tpu.pipeline_mode<synchronous>, transform_indices = @transform_7, window_bounds = array<i64: 2, 96>}, {pipeline_mode = #tpu.pipeline_mode<synchronous>, transform_indices = @transform_8, window_bounds = array<i64: 2, 32, 32>}, {pipeline_mode = #tpu.pipeline_mode<synchronous>, transform_indices = @transform_9, window_bounds = array<i64: 2, 32>}, {pipeline_mode = #tpu.pipeline_mode<synchronous>, transform_indices = @transform_10, window_bounds = array<i64: 2, 32>}, {pipeline_mode = #tpu.pipeline_mode<synchronous>, transform_indices = @transform_11, window_bounds = array<i64: 2, 32>}, {pipeline_mode = #tpu.pipeline_mode<synchronous>, transform_indices = @transform_12, window_bounds = array<i64: 2, 32, 64>}, {pipeline_mode = #tpu.pipeline_mode<synchronous>, transform_indices = @transform_13, window_bounds = array<i64: 2, 64>}, {pipeline_mode = #tpu.pipeline_mode<synchronous>, transform_indices = @transform_14, window_bounds = array<i64: 2, 64, 32>}, {pipeline_mode = #tpu.pipeline_mode<synchronous>, transform_indices = @transform_15, window_bounds = array<i64: 2, 32>}, {pipeline_mode = #tpu.pipeline_mode<synchronous>, transform_indices = @transform_16, window_bounds = array<i64: 2, 32>}, {pipeline_mode = #tpu.pipeline_mode<synchronous>, transform_indices = @transform_17, window_bounds = array<i64: 2, 32>}, {transform_indices = @transform_18, window_bounds = array<i64: 1, 1, 32>}]} {
    %c0 = arith.constant 0 : index
    %c0_0 = arith.constant 0 : index
    %0 = vector.load %arg5[%c0, %c0_0] : memref<2x32xf32, #tpu.memory_space<vmem>>, vector<1x32xf32>
    %c8_i32 = arith.constant 8 : i32
    %1 = arith.muli %arg0, %c8_i32 : i32
    %c0_i32 = arith.constant 0 : i32
    %2 = arith.addi %1, %c0_i32 : i32
    %3 = arith.index_cast %2 : i32 to index
    %4 = memref.load %arg1[%3] : memref<16xi32, #tpu.memory_space<smem>>
    %5 = arith.index_cast %4 : i32 to index
    %c0_1 = arith.constant 0 : index
    %6 = vector.load %arg3[%5, %c0_1] : memref<100x32xf32, #tpu.memory_space<vmem>>, vector<1x32xf32>
    %c0_2 = arith.constant 0 : index
    %c0_3 = arith.constant 0 : index
    %7 = vector.load %arg4[%c0_2, %c0_3] : memref<16x32xf32, #tpu.memory_space<vmem>>, vector<1x32xf32>
    %8 = arith.addf %6, %7 : vector<1x32xf32>
    %9 = arith.addf %8, %0 : vector<1x32xf32>
    %c0_4 = arith.constant 0 : index
    %c0_5 = arith.constant 0 : index
    %10 = vector.load %arg21[%c0_4, %c0_5] : memref<8x32xf32, #tpu.memory_space<vmem>>, vector<1x32xf32>
    tpu.vector_store %arg21[%c0_4, %c0_5], %9 {strides = array<i32>} : memref<8x32xf32, #tpu.memory_space<vmem>>, vector<1x32xf32>,
    %c8_i32_6 = arith.constant 8 : i32
    %11 = arith.muli %arg0, %c8_i32_6 : i32
    %c1_i32 = arith.constant 1 : i32
    %12 = arith.addi %11, %c1_i32 : i32
    %13 = arith.index_cast %12 : i32 to index
    %14 = memref.load %arg1[%13] : memref<16xi32, #tpu.memory_space<smem>>
    %15 = arith.index_cast %14 : i32 to index
    %c0_7 = arith.constant 0 : index
    %16 = vector.load %arg3[%15, %c0_7] : memref<100x32xf32, #tpu.memory_space<vmem>>, vector<1x32xf32>
    %c1 = arith.constant 1 : index
    %c0_8 = arith.constant 0 : index
    %17 = vector.load %arg4[%c1, %c0_8] : memref<16x32xf32, #tpu.memory_space<vmem>>, vector<1x32xf32>
    %18 = arith.addf %16, %17 : vector<1x32xf32>
    %19 = arith.addf %18, %0 : vector<1x32xf32>
    %c1_9 = arith.constant 1 : index
    %c0_10 = arith.constant 0 : index
    %20 = vector.load %arg21[%c1_9, %c0_10] : memref<8x32xf32, #tpu.memory_space<vmem>>, vector<1x32xf32>
    tpu.vector_store %arg21[%c1_9, %c0_10], %19 {strides = array<i32>} : memref<8x32xf32, #tpu.memory_space<vmem>>, vector<1x32xf32>,
    %c8_i32_11 = arith.constant 8 : i32
    %21 = arith.muli %arg0, %c8_i32_11 : i32
    %c2_i32 = arith.constant 2 : i32
    %22 = arith.addi %21, %c2_i32 : i32
    %23 = arith.index_cast %22 : i32 to index
    %24 = memref.load %arg1[%23] : memref<16xi32, #tpu.memory_space<smem>>
    %25 = arith.index_cast %24 : i32 to index
    %c0_12 = arith.constant 0 : index
    %26 = vector.load %arg3[%25, %c0_12] : memref<100x32xf32, #tpu.memory_space<vmem>>, vector<1x32xf32>
    %c2 = arith.constant 2 : index
    %c0_13 = arith.constant 0 : index
    %27 = vector.load %arg4[%c2, %c0_13] : memref<16x32xf32, #tpu.memory_space<vmem>>, vector<1x32xf32>
    %28 = arith.addf %26, %27 : vector<1x32xf32>
    %29 = arith.addf %28, %0 : vector<1x32xf32>
    %c2_14 = arith.constant 2 : index
    %c0_15 = arith.constant 0 : index
    %30 = vector.load %arg21[%c2_14, %c0_15] : memref<8x32xf32, #tpu.memory_space<vmem>>, vector<1x32xf32>
    tpu.vector_store %arg21[%c2_14, %c0_15], %29 {strides = array<i32>} : memref<8x32xf32, #tpu.memory_space<vmem>>, vector<1x32xf32>,
    %c8_i32_16 = arith.constant 8 : i32
    %31 = arith.muli %arg0, %c8_i32_16 : i32
    %c3_i32 = arith.constant 3 : i32
    %32 = arith.addi %31, %c3_i32 : i32
    %33 = arith.index_cast %32 : i32 to index
    %34 = memref.load %arg1[%33] : memref<16xi32, #tpu.memory_space<smem>>
    %35 = arith.index_cast %34 : i32 to index
    %c0_17 = arith.constant 0 : index
    %36 = vector.load %arg3[%35, %c0_17] : memref<100x32xf32, #tpu.memory_space<vmem>>, vector<1x32xf32>
    %c3 = arith.constant 3 : index
    %c0_18 = arith.constant 0 : index
    %37 = vector.load %arg4[%c3, %c0_18] : memref<16x32xf32, #tpu.memory_space<vmem>>, vector<1x32xf32>
    %38 = arith.addf %36, %37 : vector<1x32xf32>
    %39 = arith.addf %38, %0 : vector<1x32xf32>
    %c3_19 = arith.constant 3 : index
    %c0_20 = arith.constant 0 : index
    %40 = vector.load %arg21[%c3_19, %c0_20] : memref<8x32xf32, #tpu.memory_space<vmem>>, vector<1x32xf32>
    tpu.vector_store %arg21[%c3_19, %c0_20], %39 {strides = array<i32>} : memref<8x32xf32, #tpu.memory_space<vmem>>, vector<1x32xf32>,
    %c8_i32_21 = arith.constant 8 : i32
    %41 = arith.muli %arg0, %c8_i32_21 : i32
    %c4_i32 = arith.constant 4 : i32
    %42 = arith.addi %41, %c4_i32 : i32
    %43 = arith.index_cast %42 : i32 to index
    %44 = memref.load %arg1[%43] : memref<16xi32, #tpu.memory_space<smem>>
    %45 = arith.index_cast %44 : i32 to index
    %c0_22 = arith.constant 0 : index
    %46 = vector.load %arg3[%45, %c0_22] : memref<100x32xf32, #tpu.memory_space<vmem>>, vector<1x32xf32>
    %c4 = arith.constant 4 : index
    %c0_23 = arith.constant 0 : index
    %47 = vector.load %arg4[%c4, %c0_23] : memref<16x32xf32, #tpu.memory_space<vmem>>, vector<1x32xf32>
    %48 = arith.addf %46, %47 : vector<1x32xf32>
    %49 = arith.addf %48, %0 : vector<1x32xf32>
    %c4_24 = arith.constant 4 : index
    %c0_25 = arith.constant 0 : index
    %50 = vector.load %arg21[%c4_24, %c0_25] : memref<8x32xf32, #tpu.memory_space<vmem>>, vector<1x32xf32>
    tpu.vector_store %arg21[%c4_24, %c0_25], %49 {strides = array<i32>} : memref<8x32xf32, #tpu.memory_space<vmem>>, vector<1x32xf32>,
    %c8_i32_26 = arith.constant 8 : i32
    %51 = arith.muli %arg0, %c8_i32_26 : i32
    %c5_i32 = arith.constant 5 : i32
    %52 = arith.addi %51, %c5_i32 : i32
    %53 = arith.index_cast %52 : i32 to index
    %54 = memref.load %arg1[%53] : memref<16xi32, #tpu.memory_space<smem>>
    %55 = arith.index_cast %54 : i32 to index
    %c0_27 = arith.constant 0 : index
    %56 = vector.load %arg3[%55, %c0_27] : memref<100x32xf32, #tpu.memory_space<vmem>>, vector<1x32xf32>
    %c5 = arith.constant 5 : index
    %c0_28 = arith.constant 0 : index
    %57 = vector.load %arg4[%c5, %c0_28] : memref<16x32xf32, #tpu.memory_space<vmem>>, vector<1x32xf32>
    %58 = arith.addf %56, %57 : vector<1x32xf32>
    %59 = arith.addf %58, %0 : vector<1x32xf32>
    %c5_29 = arith.constant 5 : index
    %c0_30 = arith.constant 0 : index
    %60 = vector.load %arg21[%c5_29, %c0_30] : memref<8x32xf32, #tpu.memory_space<vmem>>, vector<1x32xf32>
    tpu.vector_store %arg21[%c5_29, %c0_30], %59 {strides = array<i32>} : memref<8x32xf32, #tpu.memory_space<vmem>>, vector<1x32xf32>,
    %c8_i32_31 = arith.constant 8 : i32
    %61 = arith.muli %arg0, %c8_i32_31 : i32
    %c6_i32 = arith.constant 6 : i32
    %62 = arith.addi %61, %c6_i32 : i32
    %63 = arith.index_cast %62 : i32 to index
    %64 = memref.load %arg1[%63] : memref<16xi32, #tpu.memory_space<smem>>
    %65 = arith.index_cast %64 : i32 to index
    %c0_32 = arith.constant 0 : index
    %66 = vector.load %arg3[%65, %c0_32] : memref<100x32xf32, #tpu.memory_space<vmem>>, vector<1x32xf32>
    %c6 = arith.constant 6 : index
    %c0_33 = arith.constant 0 : index
    %67 = vector.load %arg4[%c6, %c0_33] : memref<16x32xf32, #tpu.memory_space<vmem>>, vector<1x32xf32>
    %68 = arith.addf %66, %67 : vector<1x32xf32>
    %69 = arith.addf %68, %0 : vector<1x32xf32>
    %c6_34 = arith.constant 6 : index
    %c0_35 = arith.constant 0 : index
    %70 = vector.load %arg21[%c6_34, %c0_35] : memref<8x32xf32, #tpu.memory_space<vmem>>, vector<1x32xf32>
    tpu.vector_store %arg21[%c6_34, %c0_35], %69 {strides = array<i32>} : memref<8x32xf32, #tpu.memory_space<vmem>>, vector<1x32xf32>,
    %c8_i32_36 = arith.constant 8 : i32
    %71 = arith.muli %arg0, %c8_i32_36 : i32
    %c7_i32 = arith.constant 7 : i32
    %72 = arith.addi %71, %c7_i32 : i32
    %73 = arith.index_cast %72 : i32 to index
    %74 = memref.load %arg1[%73] : memref<16xi32, #tpu.memory_space<smem>>
    %75 = arith.index_cast %74 : i32 to index
    %c0_37 = arith.constant 0 : index
    %76 = vector.load %arg3[%75, %c0_37] : memref<100x32xf32, #tpu.memory_space<vmem>>, vector<1x32xf32>
    %c7 = arith.constant 7 : index
    %c0_38 = arith.constant 0 : index
    %77 = vector.load %arg4[%c7, %c0_38] : memref<16x32xf32, #tpu.memory_space<vmem>>, vector<1x32xf32>
    %78 = arith.addf %76, %77 : vector<1x32xf32>
    %79 = arith.addf %78, %0 : vector<1x32xf32>
    %c7_39 = arith.constant 7 : index
    %c0_40 = arith.constant 0 : index
    %80 = vector.load %arg21[%c7_39, %c0_40] : memref<8x32xf32, #tpu.memory_space<vmem>>, vector<1x32xf32>
    tpu.vector_store %arg21[%c7_39, %c0_40], %79 {strides = array<i32>} : memref<8x32xf32, #tpu.memory_space<vmem>>, vector<1x32xf32>,
    %c0_41 = arith.constant 0 : index
    %c0_42 = arith.constant 0 : index
    %81 = vector.load %arg21[%c0_41, %c0_42] : memref<8x32xf32, #tpu.memory_space<vmem>>, vector<8x32xf32>
    %c0_43 = arith.constant 0 : index
    %c0_44 = arith.constant 0 : index
    %82 = vector.load %arg6[%c0_43, %c0_44] : memref<1x32xf32, #tpu.memory_space<vmem>>, vector<1x32xf32>
    %c0_45 = arith.constant 0 : index
    %c0_46 = arith.constant 0 : index
    %83 = vector.load %arg7[%c0_45, %c0_46] : memref<1x32xf32, #tpu.memory_space<vmem>>, vector<1x32xf32>
    %cst = arith.constant dense<0.000000e+00> : vector<8xf32>
    %84 = vector.multi_reduction <add>, %81, %cst [1] : vector<8x32xf32> to vector<8xf32>
    %85 = vector.shape_cast %84 : vector<8xf32> to vector<8x1xf32>
    %cst_47 = arith.constant 3.200000e+01 : f32
    %86 = vector.broadcast %cst_47 : f32 to vector<8x1xf32>
    %87 = arith.divf %85, %86 : vector<8x1xf32>
    %88 = vector.broadcast %87 : vector<8x1xf32> to vector<8x32xf32>
    %89 = arith.subf %81, %88 : vector<8x32xf32>
    %90 = arith.mulf %89, %89 : vector<8x32xf32>
    %cst_48 = arith.constant dense<0.000000e+00> : vector<8xf32>
    %91 = vector.multi_reduction <add>, %90, %cst_48 [1] : vector<8x32xf32> to vector<8xf32>
    %92 = vector.shape_cast %91 : vector<8xf32> to vector<8x1xf32>
    %cst_49 = arith.constant 3.200000e+01 : f32
    %93 = vector.broadcast %cst_49 : f32 to vector<8x1xf32>
    %94 = arith.divf %92, %93 : vector<8x1xf32>
    %cst_50 = arith.constant 9.99999996E-13 : f32
    %95 = vector.broadcast %cst_50 : f32 to vector<8x1xf32>
    %96 = arith.addf %94, %95 : vector<8x1xf32>
    %97 = math.rsqrt %96 : vector<8x1xf32>
    %98 = vector.broadcast %87 : vector<8x1xf32> to vector<8x32xf32>
    %99 = arith.subf %81, %98 : vector<8x32xf32>
    %100 = vector.broadcast %97 : vector<8x1xf32> to vector<8x32xf32>
    %101 = arith.mulf %99, %100 : vector<8x32xf32>
    %102 = vector.broadcast %82 : vector<1x32xf32> to vector<8x32xf32>
    %103 = arith.mulf %101, %102 : vector<8x32xf32>
    %104 = vector.broadcast %83 : vector<1x32xf32> to vector<8x32xf32>
    %105 = arith.addf %103, %104 : vector<8x32xf32>
    %106 = arith.index_cast %arg0 : i32 to index
    %c0_51 = arith.constant 0 : index
    %107 = vector.load %arg2[%106, %c0_51] : memref<2x8xf32, #tpu.memory_space<vmem>>, vector<1x8xf32>
    %cst_52 = arith.constant 1.000000e+00 : f32
    %108 = vector.broadcast %cst_52 : f32 to vector<1x8xf32>
    %109 = arith.subf %108, %107 : vector<1x8xf32>
    %cst_53 = arith.constant -1.000000e+09 : f32
    %110 = vector.broadcast %cst_53 : f32 to vector<1x8xf32>
    %111 = arith.mulf %109, %110 : vector<1x8xf32>
    %112 = arith.truncf %105 : vector<8x32xf32> to vector<8x32xbf16>
    %c0_54 = arith.constant 0 : index
    %c0_55 = arith.constant 0 : index
    %c0_56 = arith.constant 0 : index
    %113 = vector.load %arg8[%c0_54, %c0_55, %c0_56] : memref<2x32x96xbf16, #tpu.memory_space<vmem>>, vector<1x32x96xbf16>
    %114 = vector.shape_cast %113 : vector<1x32x96xbf16> to vector<32x96xbf16>
    %cst_57 = arith.constant dense<0.000000e+00> : vector<8x96xf32>
    %115 = tpu.matmul %112, %114, %cst_57 {dimension_numbers = #tpu.dot_dimension_numbers<[1], [0], [0], [1], [0, 0, 1, 1], [], []>} : vector<8x32xbf16>, vector<32x96xbf16>, vector<8x96xf32> -> vector<8x96xf32>
    %c0_58 = arith.constant 0 : index
    %c0_59 = arith.constant 0 : index
    %116 = vector.load %arg9[%c0_58, %c0_59] : memref<2x96xf32, #tpu.memory_space<vmem>>, vector<1x96xf32>
    %117 = vector.broadcast %116 : vector<1x96xf32> to vector<8x96xf32>
    %118 = arith.addf %115, %117 : vector<8x96xf32>
    %119 = vector.extract_strided_slice %118 {offsets = [0, 0], sizes = [8, 32], strides = [1, 1]} : vector<8x96xf32> to vector<8x32xf32>
    %120 = vector.extract_strided_slice %118 {offsets = [0, 32], sizes = [8, 32], strides = [1, 1]} : vector<8x96xf32> to vector<8x32xf32>
    %121 = vector.extract_strided_slice %118 {offsets = [0, 64], sizes = [8, 32], strides = [1, 1]} : vector<8x96xf32> to vector<8x32xf32>
    %122 = vector.extract_strided_slice %119 {offsets = [0, 0], sizes = [8, 8], strides = [1, 1]} : vector<8x32xf32> to vector<8x8xf32>
    %123 = vector.extract_strided_slice %119 {offsets = [0, 8], sizes = [8, 8], strides = [1, 1]} : vector<8x32xf32> to vector<8x8xf32>
    %124 = vector.extract_strided_slice %119 {offsets = [0, 16], sizes = [8, 8], strides = [1, 1]} : vector<8x32xf32> to vector<8x8xf32>
    %125 = vector.extract_strided_slice %119 {offsets = [0, 24], sizes = [8, 8], strides = [1, 1]} : vector<8x32xf32> to vector<8x8xf32>
    %126 = vector.shape_cast %122 : vector<8x8xf32> to vector<1x8x8xf32>
    %127 = vector.shape_cast %123 : vector<8x8xf32> to vector<1x8x8xf32>
    %128 = vector.shape_cast %124 : vector<8x8xf32> to vector<1x8x8xf32>
    %129 = vector.shape_cast %125 : vector<8x8xf32> to vector<1x8x8xf32>
    %130 = tpu.concatenate %126, %127, %128, %129 in 0 : vector<1x8x8xf32>, vector<1x8x8xf32>, vector<1x8x8xf32>, vector<1x8x8xf32> -> vector<4x8x8xf32>
    %131 = arith.truncf %130 : vector<4x8x8xf32> to vector<4x8x8xbf16>
    %132 = vector.extract_strided_slice %120 {offsets = [0, 0], sizes = [8, 8], strides = [1, 1]} : vector<8x32xf32> to vector<8x8xf32>
    %133 = vector.extract_strided_slice %120 {offsets = [0, 8], sizes = [8, 8], strides = [1, 1]} : vector<8x32xf32> to vector<8x8xf32>
    %134 = vector.extract_strided_slice %120 {offsets = [0, 16], sizes = [8, 8], strides = [1, 1]} : vector<8x32xf32> to vector<8x8xf32>
    %135 = vector.extract_strided_slice %120 {offsets = [0, 24], sizes = [8, 8], strides = [1, 1]} : vector<8x32xf32> to vector<8x8xf32>
    %136 = vector.shape_cast %132 : vector<8x8xf32> to vector<1x8x8xf32>
    %137 = vector.shape_cast %133 : vector<8x8xf32> to vector<1x8x8xf32>
    %138 = vector.shape_cast %134 : vector<8x8xf32> to vector<1x8x8xf32>
    %139 = vector.shape_cast %135 : vector<8x8xf32> to vector<1x8x8xf32>
    %140 = tpu.concatenate %136, %137, %138, %139 in 0 : vector<1x8x8xf32>, vector<1x8x8xf32>, vector<1x8x8xf32>, vector<1x8x8xf32> -> vector<4x8x8xf32>
    %141 = arith.truncf %140 : vector<4x8x8xf32> to vector<4x8x8xbf16>
    %142 = vector.extract_strided_slice %121 {offsets = [0, 0], sizes = [8, 8], strides = [1, 1]} : vector<8x32xf32> to vector<8x8xf32>
    %143 = vector.extract_strided_slice %121 {offsets = [0, 8], sizes = [8, 8], strides = [1, 1]} : vector<8x32xf32> to vector<8x8xf32>
    %144 = vector.extract_strided_slice %121 {offsets = [0, 16], sizes = [8, 8], strides = [1, 1]} : vector<8x32xf32> to vector<8x8xf32>
    %145 = vector.extract_strided_slice %121 {offsets = [0, 24], sizes = [8, 8], strides = [1, 1]} : vector<8x32xf32> to vector<8x8xf32>
    %146 = vector.shape_cast %142 : vector<8x8xf32> to vector<1x8x8xf32>
    %147 = vector.shape_cast %143 : vector<8x8xf32> to vector<1x8x8xf32>
    %148 = vector.shape_cast %144 : vector<8x8xf32> to vector<1x8x8xf32>
    %149 = vector.shape_cast %145 : vector<8x8xf32> to vector<1x8x8xf32>
    %150 = tpu.concatenate %146, %147, %148, %149 in 0 : vector<1x8x8xf32>, vector<1x8x8xf32>, vector<1x8x8xf32>, vector<1x8x8xf32> -> vector<4x8x8xf32>
    %151 = arith.truncf %150 : vector<4x8x8xf32> to vector<4x8x8xbf16>
    "tpu.trace_start"() <{level = 10 : i32, message = "hqd,hkd->hqk"}> : () -> ()
    %cst_60 = arith.constant dense<0.000000e+00> : vector<4x8x8xf32>
    %152 = tpu.matmul %131, %141, %cst_60 {dimension_numbers = #tpu.dot_dimension_numbers<[2], [2], [1], [1], [0, 0, 0, 1, 1, 1], [0], [0]>} : vector<4x8x8xbf16>, vector<4x8x8xbf16>, vector<4x8x8xf32> -> vector<4x8x8xf32>
    "tpu.trace_stop"() : () -> ()
    %cst_61 = arith.constant 0.353553385 : f32
    %153 = vector.broadcast %cst_61 : f32 to vector<4x8x8xf32>
    %154 = arith.mulf %152, %153 : vector<4x8x8xf32>
    %155 = vector.shape_cast %111 : vector<1x8xf32> to vector<1x1x8xf32>
    %156 = vector.broadcast %155 : vector<1x1x8xf32> to vector<4x8x8xf32>
    %157 = arith.addf %154, %156 : vector<4x8x8xf32>
    %cst_62 = arith.constant dense<0xFF800000> : vector<4x8xf32>
    %158 = vector.multi_reduction <maximumf>, %157, %cst_62 [2] : vector<4x8x8xf32> to vector<4x8xf32>
    %159 = vector.shape_cast %158 : vector<4x8xf32> to vector<4x8x1xf32>
    %160 = vector.broadcast %159 : vector<4x8x1xf32> to vector<4x8x8xf32>
    %161 = arith.subf %157, %160 : vector<4x8x8xf32>
    %162 = math.exp %161 : vector<4x8x8xf32>
    %cst_63 = arith.constant dense<0.000000e+00> : vector<4x8xf32>
    %163 = vector.multi_reduction <add>, %162, %cst_63 [2] : vector<4x8x8xf32> to vector<4x8xf32>
    %164 = vector.shape_cast %163 : vector<4x8xf32> to vector<4x8x1xf32>
    %165 = tpu.reciprocal %164 {approx = true} : vector<4x8x1xf32> -> vector<4x8x1xf32>
    %166 = vector.broadcast %165 : vector<4x8x1xf32> to vector<4x8x8xf32>
    %167 = arith.mulf %162, %166 : vector<4x8x8xf32>
    %168 = arith.truncf %167 : vector<4x8x8xf32> to vector<4x8x8xbf16>
    "tpu.trace_start"() <{level = 10 : i32, message = "hqk,hkd->hqd"}> : () -> ()
    %cst_64 = arith.constant dense<0.000000e+00> : vector<4x8x8xf32>
    %169 = tpu.matmul %168, %151, %cst_64 {dimension_numbers = #tpu.dot_dimension_numbers<[2], [1], [1], [2], [0, 0, 0, 1, 1, 2], [0], [0]>} : vector<4x8x8xbf16>, vector<4x8x8xbf16>, vector<4x8x8xf32> -> vector<4x8x8xf32>
    "tpu.trace_stop"() : () -> ()
    %170 = vector.extract_strided_slice %169 {offsets = [0, 0, 0], sizes = [1, 8, 8], strides = [1, 1, 1]} : vector<4x8x8xf32> to vector<1x8x8xf32>
    %171 = vector.shape_cast %170 : vector<1x8x8xf32> to vector<8x8xf32>
    %172 = vector.extract_strided_slice %169 {offsets = [1, 0, 0], sizes = [1, 8, 8], strides = [1, 1, 1]} : vector<4x8x8xf32> to vector<1x8x8xf32>
    %173 = vector.shape_cast %172 : vector<1x8x8xf32> to vector<8x8xf32>
    %174 = vector.extract_strided_slice %169 {offsets = [2, 0, 0], sizes = [1, 8, 8], strides = [1, 1, 1]} : vector<4x8x8xf32> to vector<1x8x8xf32>
    %175 = vector.shape_cast %174 : vector<1x8x8xf32> to vector<8x8xf32>
    %176 = vector.extract_strided_slice %169 {offsets = [3, 0, 0], sizes = [1, 8, 8], strides = [1, 1, 1]} : vector<4x8x8xf32> to vector<1x8x8xf32>
    %177 = vector.shape_cast %176 : vector<1x8x8xf32> to vector<8x8xf32>
    %178 = tpu.concatenate %171, %173, %175, %177 in 1 : vector<8x8xf32>, vector<8x8xf32>, vector<8x8xf32>, vector<8x8xf32> -> vector<8x32xf32>
    %179 = arith.truncf %178 : vector<8x32xf32> to vector<8x32xbf16>
    %c0_65 = arith.constant 0 : index
    %c0_66 = arith.constant 0 : index
    %c0_67 = arith.constant 0 : index
    %180 = vector.load %arg10[%c0_65, %c0_66, %c0_67] : memref<2x32x32xbf16, #tpu.memory_space<vmem>>, vector<1x32x32xbf16>
    %181 = vector.shape_cast %180 : vector<1x32x32xbf16> to vector<32x32xbf16>
    %cst_68 = arith.constant dense<0.000000e+00> : vector<8x32xf32>
    %182 = tpu.matmul %179, %181, %cst_68 {dimension_numbers = #tpu.dot_dimension_numbers<[1], [0], [0], [1], [0, 0, 1, 1], [], []>} : vector<8x32xbf16>, vector<32x32xbf16>, vector<8x32xf32> -> vector<8x32xf32>
    %c0_69 = arith.constant 0 : index
    %c0_70 = arith.constant 0 : index
    %183 = vector.load %arg11[%c0_69, %c0_70] : memref<2x32xf32, #tpu.memory_space<vmem>>, vector<1x32xf32>
    %184 = vector.broadcast %183 : vector<1x32xf32> to vector<8x32xf32>
    %185 = arith.addf %182, %184 : vector<8x32xf32>
    %186 = arith.addf %105, %185 : vector<8x32xf32>
    %c0_71 = arith.constant 0 : index
    %c0_72 = arith.constant 0 : index
    %187 = vector.load %arg12[%c0_71, %c0_72] : memref<2x32xf32, #tpu.memory_space<vmem>>, vector<1x32xf32>
    %c0_73 = arith.constant 0 : index
    %c0_74 = arith.constant 0 : index
    %188 = vector.load %arg13[%c0_73, %c0_74] : memref<2x32xf32, #tpu.memory_space<vmem>>, vector<1x32xf32>
    %cst_75 = arith.constant dense<0.000000e+00> : vector<8xf32>
    %189 = vector.multi_reduction <add>, %186, %cst_75 [1] : vector<8x32xf32> to vector<8xf32>
    %190 = vector.shape_cast %189 : vector<8xf32> to vector<8x1xf32>
    %cst_76 = arith.constant 3.200000e+01 : f32
    %191 = vector.broadcast %cst_76 : f32 to vector<8x1xf32>
    %192 = arith.divf %190, %191 : vector<8x1xf32>
    %193 = vector.broadcast %192 : vector<8x1xf32> to vector<8x32xf32>
    %194 = arith.subf %186, %193 : vector<8x32xf32>
    %195 = arith.mulf %194, %194 : vector<8x32xf32>
    %cst_77 = arith.constant dense<0.000000e+00> : vector<8xf32>
    %196 = vector.multi_reduction <add>, %195, %cst_77 [1] : vector<8x32xf32> to vector<8xf32>
    %197 = vector.shape_cast %196 : vector<8xf32> to vector<8x1xf32>
    %cst_78 = arith.constant 3.200000e+01 : f32
    %198 = vector.broadcast %cst_78 : f32 to vector<8x1xf32>
    %199 = arith.divf %197, %198 : vector<8x1xf32>
    %cst_79 = arith.constant 9.99999996E-13 : f32
    %200 = vector.broadcast %cst_79 : f32 to vector<8x1xf32>
    %201 = arith.addf %199, %200 : vector<8x1xf32>
    %202 = math.rsqrt %201 : vector<8x1xf32>
    %203 = vector.broadcast %192 : vector<8x1xf32> to vector<8x32xf32>
    %204 = arith.subf %186, %203 : vector<8x32xf32>
    %205 = vector.broadcast %202 : vector<8x1xf32> to vector<8x32xf32>
    %206 = arith.mulf %204, %205 : vector<8x32xf32>
    %207 = vector.broadcast %187 : vector<1x32xf32> to vector<8x32xf32>
    %208 = arith.mulf %206, %207 : vector<8x32xf32>
    %209 = vector.broadcast %188 : vector<1x32xf32> to vector<8x32xf32>
    %210 = arith.addf %208, %209 : vector<8x32xf32>
    %211 = arith.truncf %210 : vector<8x32xf32> to vector<8x32xbf16>
    %c0_80 = arith.constant 0 : index
    %c0_81 = arith.constant 0 : index
    %c0_82 = arith.constant 0 : index
    %212 = vector.load %arg14[%c0_80, %c0_81, %c0_82] : memref<2x32x64xbf16, #tpu.memory_space<vmem>>, vector<1x32x64xbf16>
    %213 = vector.shape_cast %212 : vector<1x32x64xbf16> to vector<32x64xbf16>
    %cst_83 = arith.constant dense<0.000000e+00> : vector<8x64xf32>
    %214 = tpu.matmul %211, %213, %cst_83 {dimension_numbers = #tpu.dot_dimension_numbers<[1], [0], [0], [1], [0, 0, 1, 1], [], []>} : vector<8x32xbf16>, vector<32x64xbf16>, vector<8x64xf32> -> vector<8x64xf32>
    %c0_84 = arith.constant 0 : index
    %c0_85 = arith.constant 0 : index
    %215 = vector.load %arg15[%c0_84, %c0_85] : memref<2x64xf32, #tpu.memory_space<vmem>>, vector<1x64xf32>
    %216 = vector.broadcast %215 : vector<1x64xf32> to vector<8x64xf32>
    %217 = arith.addf %214, %216 : vector<8x64xf32>
    %cst_86 = arith.constant 5.000000e-01 : f32
    %218 = vector.broadcast %cst_86 : f32 to vector<8x64xf32>
    %219 = arith.mulf %218, %217 : vector<8x64xf32>
    %cst_87 = arith.constant 4.471500e-02 : f32
    %220 = vector.broadcast %cst_87 : f32 to vector<8x64xf32>
    %221 = arith.mulf %220, %217 : vector<8x64xf32>
    %222 = arith.mulf %221, %217 : vector<8x64xf32>
    %223 = arith.mulf %222, %217 : vector<8x64xf32>
    %224 = arith.addf %217, %223 : vector<8x64xf32>
    %cst_88 = arith.constant 0.797884583 : f32
    %225 = vector.broadcast %cst_88 : f32 to vector<8x64xf32>
    %226 = arith.mulf %225, %224 : vector<8x64xf32>
    %227 = math.tanh %226 : vector<8x64xf32>
    %cst_89 = arith.constant 1.000000e+00 : f32
    %228 = vector.broadcast %cst_89 : f32 to vector<8x64xf32>
    %229 = arith.addf %228, %227 : vector<8x64xf32>
    %230 = arith.mulf %219, %229 : vector<8x64xf32>
    %231 = arith.truncf %230 : vector<8x64xf32> to vector<8x64xbf16>
    %c0_90 = arith.constant 0 : index
    %c0_91 = arith.constant 0 : index
    %c0_92 = arith.constant 0 : index
    %232 = vector.load %arg16[%c0_90, %c0_91, %c0_92] : memref<2x64x32xbf16, #tpu.memory_space<vmem>>, vector<1x64x32xbf16>
    %233 = vector.shape_cast %232 : vector<1x64x32xbf16> to vector<64x32xbf16>
    %cst_93 = arith.constant dense<0.000000e+00> : vector<8x32xf32>
    %234 = tpu.matmul %231, %233, %cst_93 {dimension_numbers = #tpu.dot_dimension_numbers<[1], [0], [0], [1], [0, 0, 1, 1], [], []>} : vector<8x64xbf16>, vector<64x32xbf16>, vector<8x32xf32> -> vector<8x32xf32>
    %c0_94 = arith.constant 0 : index
    %c0_95 = arith.constant 0 : index
    %235 = vector.load %arg17[%c0_94, %c0_95] : memref<2x32xf32, #tpu.memory_space<vmem>>, vector<1x32xf32>
    %236 = vector.broadcast %235 : vector<1x32xf32> to vector<8x32xf32>
    %237 = arith.addf %234, %236 : vector<8x32xf32>
    %238 = arith.addf %210, %237 : vector<8x32xf32>
    %c0_96 = arith.constant 0 : index
    %c0_97 = arith.constant 0 : index
    %239 = vector.load %arg18[%c0_96, %c0_97] : memref<2x32xf32, #tpu.memory_space<vmem>>, vector<1x32xf32>
    %c0_98 = arith.constant 0 : index
    %c0_99 = arith.constant 0 : index
    %240 = vector.load %arg19[%c0_98, %c0_99] : memref<2x32xf32, #tpu.memory_space<vmem>>, vector<1x32xf32>
    %cst_100 = arith.constant dense<0.000000e+00> : vector<8xf32>
    %241 = vector.multi_reduction <add>, %238, %cst_100 [1] : vector<8x32xf32> to vector<8xf32>
    %242 = vector.shape_cast %241 : vector<8xf32> to vector<8x1xf32>
    %cst_101 = arith.constant 3.200000e+01 : f32
    %243 = vector.broadcast %cst_101 : f32 to vector<8x1xf32>
    %244 = arith.divf %242, %243 : vector<8x1xf32>
    %245 = vector.broadcast %244 : vector<8x1xf32> to vector<8x32xf32>
    %246 = arith.subf %238, %245 : vector<8x32xf32>
    %247 = arith.mulf %246, %246 : vector<8x32xf32>
    %cst_102 = arith.constant dense<0.000000e+00> : vector<8xf32>
    %248 = vector.multi_reduction <add>, %247, %cst_102 [1] : vector<8x32xf32> to vector<8xf32>
    %249 = vector.shape_cast %248 : vector<8xf32> to vector<8x1xf32>
    %cst_103 = arith.constant 3.200000e+01 : f32
    %250 = vector.broadcast %cst_103 : f32 to vector<8x1xf32>
    %251 = arith.divf %249, %250 : vector<8x1xf32>
    %cst_104 = arith.constant 9.99999996E-13 : f32
    %252 = vector.broadcast %cst_104 : f32 to vector<8x1xf32>
    %253 = arith.addf %251, %252 : vector<8x1xf32>
    %254 = math.rsqrt %253 : vector<8x1xf32>
    %255 = vector.broadcast %244 : vector<8x1xf32> to vector<8x32xf32>
    %256 = arith.subf %238, %255 : vector<8x32xf32>
    %257 = vector.broadcast %254 : vector<8x1xf32> to vector<8x32xf32>
    %258 = arith.mulf %256, %257 : vector<8x32xf32>
    %259 = vector.broadcast %239 : vector<1x32xf32> to vector<8x32xf32>
    %260 = arith.mulf %258, %259 : vector<8x32xf32>
    %261 = vector.broadcast %240 : vector<1x32xf32> to vector<8x32xf32>
    %262 = arith.addf %260, %261 : vector<8x32xf32>
    %263 = arith.truncf %262 : vector<8x32xf32> to vector<8x32xbf16>
    %c1_105 = arith.constant 1 : index
    %c0_106 = arith.constant 0 : index
    %c0_107 = arith.constant 0 : index
    %264 = vector.load %arg8[%c1_105, %c0_106, %c0_107] : memref<2x32x96xbf16, #tpu.memory_space<vmem>>, vector<1x32x96xbf16>
    %265 = vector.shape_cast %264 : vector<1x32x96xbf16> to vector<32x96xbf16>
    %cst_108 = arith.constant dense<0.000000e+00> : vector<8x96xf32>
    %266 = tpu.matmul %263, %265, %cst_108 {dimension_numbers = #tpu.dot_dimension_numbers<[1], [0], [0], [1], [0, 0, 1, 1], [], []>} : vector<8x32xbf16>, vector<32x96xbf16>, vector<8x96xf32> -> vector<8x96xf32>
    %c1_109 = arith.constant 1 : index
    %c0_110 = arith.constant 0 : index
    %267 = vector.load %arg9[%c1_109, %c0_110] : memref<2x96xf32, #tpu.memory_space<vmem>>, vector<1x96xf32>
    %268 = vector.broadcast %267 : vector<1x96xf32> to vector<8x96xf32>
    %269 = arith.addf %266, %268 : vector<8x96xf32>
    %270 = vector.extract_strided_slice %269 {offsets = [0, 0], sizes = [8, 32], strides = [1, 1]} : vector<8x96xf32> to vector<8x32xf32>
    %271 = vector.extract_strided_slice %269 {offsets = [0, 32], sizes = [8, 32], strides = [1, 1]} : vector<8x96xf32> to vector<8x32xf32>
    %272 = vector.extract_strided_slice %269 {offsets = [0, 64], sizes = [8, 32], strides = [1, 1]} : vector<8x96xf32> to vector<8x32xf32>
    %273 = vector.extract_strided_slice %270 {offsets = [0, 0], sizes = [8, 8], strides = [1, 1]} : vector<8x32xf32> to vector<8x8xf32>
    %274 = vector.extract_strided_slice %270 {offsets = [0, 8], sizes = [8, 8], strides = [1, 1]} : vector<8x32xf32> to vector<8x8xf32>
    %275 = vector.extract_strided_slice %270 {offsets = [0, 16], sizes = [8, 8], strides = [1, 1]} : vector<8x32xf32> to vector<8x8xf32>
    %276 = vector.extract_strided_slice %270 {offsets = [0, 24], sizes = [8, 8], strides = [1, 1]} : vector<8x32xf32> to vector<8x8xf32>
    %277 = vector.shape_cast %273 : vector<8x8xf32> to vector<1x8x8xf32>
    %278 = vector.shape_cast %274 : vector<8x8xf32> to vector<1x8x8xf32>
    %279 = vector.shape_cast %275 : vector<8x8xf32> to vector<1x8x8xf32>
    %280 = vector.shape_cast %276 : vector<8x8xf32> to vector<1x8x8xf32>
    %281 = tpu.concatenate %277, %278, %279, %280 in 0 : vector<1x8x8xf32>, vector<1x8x8xf32>, vector<1x8x8xf32>, vector<1x8x8xf32> -> vector<4x8x8xf32>
    %282 = arith.truncf %281 : vector<4x8x8xf32> to vector<4x8x8xbf16>
    %283 = vector.extract_strided_slice %271 {offsets = [0, 0], sizes = [8, 8], strides = [1, 1]} : vector<8x32xf32> to vector<8x8xf32>
    %284 = vector.extract_strided_slice %271 {offsets = [0, 8], sizes = [8, 8], strides = [1, 1]} : vector<8x32xf32> to vector<8x8xf32>
    %285 = vector.extract_strided_slice %271 {offsets = [0, 16], sizes = [8, 8], strides = [1, 1]} : vector<8x32xf32> to vector<8x8xf32>
    %286 = vector.extract_strided_slice %271 {offsets = [0, 24], sizes = [8, 8], strides = [1, 1]} : vector<8x32xf32> to vector<8x8xf32>
    %287 = vector.shape_cast %283 : vector<8x8xf32> to vector<1x8x8xf32>
    %288 = vector.shape_cast %284 : vector<8x8xf32> to vector<1x8x8xf32>
    %289 = vector.shape_cast %285 : vector<8x8xf32> to vector<1x8x8xf32>
    %290 = vector.shape_cast %286 : vector<8x8xf32> to vector<1x8x8xf32>
    %291 = tpu.concatenate %287, %288, %289, %290 in 0 : vector<1x8x8xf32>, vector<1x8x8xf32>, vector<1x8x8xf32>, vector<1x8x8xf32> -> vector<4x8x8xf32>
    %292 = arith.truncf %291 : vector<4x8x8xf32> to vector<4x8x8xbf16>
    %293 = vector.extract_strided_slice %272 {offsets = [0, 0], sizes = [8, 8], strides = [1, 1]} : vector<8x32xf32> to vector<8x8xf32>
    %294 = vector.extract_strided_slice %272 {offsets = [0, 8], sizes = [8, 8], strides = [1, 1]} : vector<8x32xf32> to vector<8x8xf32>
    %295 = vector.extract_strided_slice %272 {offsets = [0, 16], sizes = [8, 8], strides = [1, 1]} : vector<8x32xf32> to vector<8x8xf32>
    %296 = vector.extract_strided_slice %272 {offsets = [0, 24], sizes = [8, 8], strides = [1, 1]} : vector<8x32xf32> to vector<8x8xf32>
    %297 = vector.shape_cast %293 : vector<8x8xf32> to vector<1x8x8xf32>
    %298 = vector.shape_cast %294 : vector<8x8xf32> to vector<1x8x8xf32>
    %299 = vector.shape_cast %295 : vector<8x8xf32> to vector<1x8x8xf32>
    %300 = vector.shape_cast %296 : vector<8x8xf32> to vector<1x8x8xf32>
    %301 = tpu.concatenate %297, %298, %299, %300 in 0 : vector<1x8x8xf32>, vector<1x8x8xf32>, vector<1x8x8xf32>, vector<1x8x8xf32> -> vector<4x8x8xf32>
    %302 = arith.truncf %301 : vector<4x8x8xf32> to vector<4x8x8xbf16>
    "tpu.trace_start"() <{level = 10 : i32, message = "hqd,hkd->hqk"}> : () -> ()
    %cst_111 = arith.constant dense<0.000000e+00> : vector<4x8x8xf32>
    %303 = tpu.matmul %282, %292, %cst_111 {dimension_numbers = #tpu.dot_dimension_numbers<[2], [2], [1], [1], [0, 0, 0, 1, 1, 1], [0], [0]>} : vector<4x8x8xbf16>, vector<4x8x8xbf16>, vector<4x8x8xf32> -> vector<4x8x8xf32>
    "tpu.trace_stop"() : () -> ()
    %cst_112 = arith.constant 0.353553385 : f32
    %304 = vector.broadcast %cst_112 : f32 to vector<4x8x8xf32>
    %305 = arith.mulf %303, %304 : vector<4x8x8xf32>
    %306 = vector.shape_cast %111 : vector<1x8xf32> to vector<1x1x8xf32>
    %307 = vector.broadcast %306 : vector<1x1x8xf32> to vector<4x8x8xf32>
    %308 = arith.addf %305, %307 : vector<4x8x8xf32>
    %cst_113 = arith.constant dense<0xFF800000> : vector<4x8xf32>
    %309 = vector.multi_reduction <maximumf>, %308, %cst_113 [2] : vector<4x8x8xf32> to vector<4x8xf32>
    %310 = vector.shape_cast %309 : vector<4x8xf32> to vector<4x8x1xf32>
    %311 = vector.broadcast %310 : vector<4x8x1xf32> to vector<4x8x8xf32>
    %312 = arith.subf %308, %311 : vector<4x8x8xf32>
    %313 = math.exp %312 : vector<4x8x8xf32>
    %cst_114 = arith.constant dense<0.000000e+00> : vector<4x8xf32>
    %314 = vector.multi_reduction <add>, %313, %cst_114 [2] : vector<4x8x8xf32> to vector<4x8xf32>
    %315 = vector.shape_cast %314 : vector<4x8xf32> to vector<4x8x1xf32>
    %316 = tpu.reciprocal %315 {approx = true} : vector<4x8x1xf32> -> vector<4x8x1xf32>
    %317 = vector.broadcast %316 : vector<4x8x1xf32> to vector<4x8x8xf32>
    %318 = arith.mulf %313, %317 : vector<4x8x8xf32>
    %319 = arith.truncf %318 : vector<4x8x8xf32> to vector<4x8x8xbf16>
    "tpu.trace_start"() <{level = 10 : i32, message = "hqk,hkd->hqd"}> : () -> ()
    %cst_115 = arith.constant dense<0.000000e+00> : vector<4x8x8xf32>
    %320 = tpu.matmul %319, %302, %cst_115 {dimension_numbers = #tpu.dot_dimension_numbers<[2], [1], [1], [2], [0, 0, 0, 1, 1, 2], [0], [0]>} : vector<4x8x8xbf16>, vector<4x8x8xbf16>, vector<4x8x8xf32> -> vector<4x8x8xf32>
    "tpu.trace_stop"() : () -> ()
    %321 = vector.extract_strided_slice %320 {offsets = [0, 0, 0], sizes = [1, 8, 8], strides = [1, 1, 1]} : vector<4x8x8xf32> to vector<1x8x8xf32>
    %322 = vector.shape_cast %321 : vector<1x8x8xf32> to vector<8x8xf32>
    %323 = vector.extract_strided_slice %320 {offsets = [1, 0, 0], sizes = [1, 8, 8], strides = [1, 1, 1]} : vector<4x8x8xf32> to vector<1x8x8xf32>
    %324 = vector.shape_cast %323 : vector<1x8x8xf32> to vector<8x8xf32>
    %325 = vector.extract_strided_slice %320 {offsets = [2, 0, 0], sizes = [1, 8, 8], strides = [1, 1, 1]} : vector<4x8x8xf32> to vector<1x8x8xf32>
    %326 = vector.shape_cast %325 : vector<1x8x8xf32> to vector<8x8xf32>
    %327 = vector.extract_strided_slice %320 {offsets = [3, 0, 0], sizes = [1, 8, 8], strides = [1, 1, 1]} : vector<4x8x8xf32> to vector<1x8x8xf32>
    %328 = vector.shape_cast %327 : vector<1x8x8xf32> to vector<8x8xf32>
    %329 = tpu.concatenate %322, %324, %326, %328 in 1 : vector<8x8xf32>, vector<8x8xf32>, vector<8x8xf32>, vector<8x8xf32> -> vector<8x32xf32>
    %330 = arith.truncf %329 : vector<8x32xf32> to vector<8x32xbf16>
    %c1_116 = arith.constant 1 : index
    %c0_117 = arith.constant 0 : index
    %c0_118 = arith.constant 0 : index
    %331 = vector.load %arg10[%c1_116, %c0_117, %c0_118] : memref<2x32x32xbf16, #tpu.memory_space<vmem>>, vector<1x32x32xbf16>
    %332 = vector.shape_cast %331 : vector<1x32x32xbf16> to vector<32x32xbf16>
    %cst_119 = arith.constant dense<0.000000e+00> : vector<8x32xf32>
    %333 = tpu.matmul %330, %332, %cst_119 {dimension_numbers = #tpu.dot_dimension_numbers<[1], [0], [0], [1], [0, 0, 1, 1], [], []>} : vector<8x32xbf16>, vector<32x32xbf16>, vector<8x32xf32> -> vector<8x32xf32>
    %c1_120 = arith.constant 1 : index
    %c0_121 = arith.constant 0 : index
    %334 = vector.load %arg11[%c1_120, %c0_121] : memref<2x32xf32, #tpu.memory_space<vmem>>, vector<1x32xf32>
    %335 = vector.broadcast %334 : vector<1x32xf32> to vector<8x32xf32>
    %336 = arith.addf %333, %335 : vector<8x32xf32>
    %337 = arith.addf %262, %336 : vector<8x32xf32>
    %c1_122 = arith.constant 1 : index
    %c0_123 = arith.constant 0 : index
    %338 = vector.load %arg12[%c1_122, %c0_123] : memref<2x32xf32, #tpu.memory_space<vmem>>, vector<1x32xf32>
    %c1_124 = arith.constant 1 : index
    %c0_125 = arith.constant 0 : index
    %339 = vector.load %arg13[%c1_124, %c0_125] : memref<2x32xf32, #tpu.memory_space<vmem>>, vector<1x32xf32>
    %cst_126 = arith.constant dense<0.000000e+00> : vector<8xf32>
    %340 = vector.multi_reduction <add>, %337, %cst_126 [1] : vector<8x32xf32> to vector<8xf32>
    %341 = vector.shape_cast %340 : vector<8xf32> to vector<8x1xf32>
    %cst_127 = arith.constant 3.200000e+01 : f32
    %342 = vector.broadcast %cst_127 : f32 to vector<8x1xf32>
    %343 = arith.divf %341, %342 : vector<8x1xf32>
    %344 = vector.broadcast %343 : vector<8x1xf32> to vector<8x32xf32>
    %345 = arith.subf %337, %344 : vector<8x32xf32>
    %346 = arith.mulf %345, %345 : vector<8x32xf32>
    %cst_128 = arith.constant dense<0.000000e+00> : vector<8xf32>
    %347 = vector.multi_reduction <add>, %346, %cst_128 [1] : vector<8x32xf32> to vector<8xf32>
    %348 = vector.shape_cast %347 : vector<8xf32> to vector<8x1xf32>
    %cst_129 = arith.constant 3.200000e+01 : f32
    %349 = vector.broadcast %cst_129 : f32 to vector<8x1xf32>
    %350 = arith.divf %348, %349 : vector<8x1xf32>
    %cst_130 = arith.constant 9.99999996E-13 : f32
    %351 = vector.broadcast %cst_130 : f32 to vector<8x1xf32>
    %352 = arith.addf %350, %351 : vector<8x1xf32>
    %353 = math.rsqrt %352 : vector<8x1xf32>
    %354 = vector.broadcast %343 : vector<8x1xf32> to vector<8x32xf32>
    %355 = arith.subf %337, %354 : vector<8x32xf32>
    %356 = vector.broadcast %353 : vector<8x1xf32> to vector<8x32xf32>
    %357 = arith.mulf %355, %356 : vector<8x32xf32>
    %358 = vector.broadcast %338 : vector<1x32xf32> to vector<8x32xf32>
    %359 = arith.mulf %357, %358 : vector<8x32xf32>
    %360 = vector.broadcast %339 : vector<1x32xf32> to vector<8x32xf32>
    %361 = arith.addf %359, %360 : vector<8x32xf32>
    %362 = arith.truncf %361 : vector<8x32xf32> to vector<8x32xbf16>
    %c1_131 = arith.constant 1 : index
    %c0_132 = arith.constant 0 : index
    %c0_133 = arith.constant 0 : index
    %363 = vector.load %arg14[%c1_131, %c0_132, %c0_133] : memref<2x32x64xbf16, #tpu.memory_space<vmem>>, vector<1x32x64xbf16>
    %364 = vector.shape_cast %363 : vector<1x32x64xbf16> to vector<32x64xbf16>
    %cst_134 = arith.constant dense<0.000000e+00> : vector<8x64xf32>
    %365 = tpu.matmul %362, %364, %cst_134 {dimension_numbers = #tpu.dot_dimension_numbers<[1], [0], [0], [1], [0, 0, 1, 1], [], []>} : vector<8x32xbf16>, vector<32x64xbf16>, vector<8x64xf32> -> vector<8x64xf32>
    %c1_135 = arith.constant 1 : index
    %c0_136 = arith.constant 0 : index
    %366 = vector.load %arg15[%c1_135, %c0_136] : memref<2x64xf32, #tpu.memory_space<vmem>>, vector<1x64xf32>
    %367 = vector.broadcast %366 : vector<1x64xf32> to vector<8x64xf32>
    %368 = arith.addf %365, %367 : vector<8x64xf32>
    %cst_137 = arith.constant 5.000000e-01 : f32
    %369 = vector.broadcast %cst_137 : f32 to vector<8x64xf32>
    %370 = arith.mulf %369, %368 : vector<8x64xf32>
    %cst_138 = arith.constant 4.471500e-02 : f32
    %371 = vector.broadcast %cst_138 : f32 to vector<8x64xf32>
    %372 = arith.mulf %371, %368 : vector<8x64xf32>
    %373 = arith.mulf %372, %368 : vector<8x64xf32>
    %374 = arith.mulf %373, %368 : vector<8x64xf32>
    %375 = arith.addf %368, %374 : vector<8x64xf32>
    %cst_139 = arith.constant 0.797884583 : f32
    %376 = vector.broadcast %cst_139 : f32 to vector<8x64xf32>
    %377 = arith.mulf %376, %375 : vector<8x64xf32>
    %378 = math.tanh %377 : vector<8x64xf32>
    %cst_140 = arith.constant 1.000000e+00 : f32
    %379 = vector.broadcast %cst_140 : f32 to vector<8x64xf32>
    %380 = arith.addf %379, %378 : vector<8x64xf32>
    %381 = arith.mulf %370, %380 : vector<8x64xf32>
    %382 = arith.truncf %381 : vector<8x64xf32> to vector<8x64xbf16>
    %c1_141 = arith.constant 1 : index
    %c0_142 = arith.constant 0 : index
    %c0_143 = arith.constant 0 : index
    %383 = vector.load %arg16[%c1_141, %c0_142, %c0_143] : memref<2x64x32xbf16, #tpu.memory_space<vmem>>, vector<1x64x32xbf16>
    %384 = vector.shape_cast %383 : vector<1x64x32xbf16> to vector<64x32xbf16>
    %cst_144 = arith.constant dense<0.000000e+00> : vector<8x32xf32>
    %385 = tpu.matmul %382, %384, %cst_144 {dimension_numbers = #tpu.dot_dimension_numbers<[1], [0], [0], [1], [0, 0, 1, 1], [], []>} : vector<8x64xbf16>, vector<64x32xbf16>, vector<8x32xf32> -> vector<8x32xf32>
    %c1_145 = arith.constant 1 : index
    %c0_146 = arith.constant 0 : index
    %386 = vector.load %arg17[%c1_145, %c0_146] : memref<2x32xf32, #tpu.memory_space<vmem>>, vector<1x32xf32>
    %387 = vector.broadcast %386 : vector<1x32xf32> to vector<8x32xf32>
    %388 = arith.addf %385, %387 : vector<8x32xf32>
    %389 = arith.addf %361, %388 : vector<8x32xf32>
    %c1_147 = arith.constant 1 : index
    %c0_148 = arith.constant 0 : index
    %390 = vector.load %arg18[%c1_147, %c0_148] : memref<2x32xf32, #tpu.memory_space<vmem>>, vector<1x32xf32>
    %c1_149 = arith.constant 1 : index
    %c0_150 = arith.constant 0 : index
    %391 = vector.load %arg19[%c1_149, %c0_150] : memref<2x32xf32, #tpu.memory_space<vmem>>, vector<1x32xf32>
    %cst_151 = arith.constant dense<0.000000e+00> : vector<8xf32>
    %392 = vector.multi_reduction <add>, %389, %cst_151 [1] : vector<8x32xf32> to vector<8xf32>
    %393 = vector.shape_cast %392 : vector<8xf32> to vector<8x1xf32>
    %cst_152 = arith.constant 3.200000e+01 : f32
    %394 = vector.broadcast %cst_152 : f32 to vector<8x1xf32>
    %395 = arith.divf %393, %394 : vector<8x1xf32>
    %396 = vector.broadcast %395 : vector<8x1xf32> to vector<8x32xf32>
    %397 = arith.subf %389, %396 : vector<8x32xf32>
    %398 = arith.mulf %397, %397 : vector<8x32xf32>
    %cst_153 = arith.constant dense<0.000000e+00> : vector<8xf32>
    %399 = vector.multi_reduction <add>, %398, %cst_153 [1] : vector<8x32xf32> to vector<8xf32>
    %400 = vector.shape_cast %399 : vector<8xf32> to vector<8x1xf32>
    %cst_154 = arith.constant 3.200000e+01 : f32
    %401 = vector.broadcast %cst_154 : f32 to vector<8x1xf32>
    %402 = arith.divf %400, %401 : vector<8x1xf32>
    %cst_155 = arith.constant 9.99999996E-13 : f32
    %403 = vector.broadcast %cst_155 : f32 to vector<8x1xf32>
    %404 = arith.addf %402, %403 : vector<8x1xf32>
    %405 = math.rsqrt %404 : vector<8x1xf32>
    %406 = vector.broadcast %395 : vector<8x1xf32> to vector<8x32xf32>
    %407 = arith.subf %389, %406 : vector<8x32xf32>
    %408 = vector.broadcast %405 : vector<8x1xf32> to vector<8x32xf32>
    %409 = arith.mulf %407, %408 : vector<8x32xf32>
    %410 = vector.broadcast %390 : vector<1x32xf32> to vector<8x32xf32>
    %411 = arith.mulf %409, %410 : vector<8x32xf32>
    %412 = vector.broadcast %391 : vector<1x32xf32> to vector<8x32xf32>
    %413 = arith.addf %411, %412 : vector<8x32xf32>
    %414 = vector.extract_strided_slice %413 {offsets = [0, 0], sizes = [1, 32], strides = [1, 1]} : vector<8x32xf32> to vector<1x32xf32>
    %c0_156 = arith.constant 0 : index
    %c0_157 = arith.constant 0 : index
    %c0_158 = arith.constant 0 : index
    %415 = vector.load %arg20[%c0_156, %c0_157, %c0_158] : memref<1x1x32xf32, #tpu.memory_space<vmem>>, vector<1x1x32xf32>
    %416 = vector.shape_cast %415 : vector<1x1x32xf32> to vector<1x32xf32>
    %417 = vector.shape_cast %414 : vector<1x32xf32> to vector<1x1x32xf32>
    tpu.vector_store %arg20[%c0_156, %c0_157, %c0_158], %417 {strides = array<i32>} : memref<1x1x32xf32, #tpu.memory_space<vmem>>, vector<1x1x32xf32>,
    return
  }
  func.func @transform_0(%arg0: i32, %arg1: memref<16xi32, #tpu.memory_space<smem>>) -> (i32, i32) {
    %c0_i32 = arith.constant 0 : i32
    %c0_i32_0 = arith.constant 0 : i32
    %c0_i32_1 = arith.constant 0 : i32
    return %c0_i32, %c0_i32_0 : i32, i32
  }
  func.func @transform_1(%arg0: i32, %arg1: memref<16xi32, #tpu.memory_space<smem>>) -> (i32, i32) {
    %c0_i32 = arith.constant 0 : i32
    %c0_i32_0 = arith.constant 0 : i32
    %c0_i32_1 = arith.constant 0 : i32
    return %c0_i32, %c0_i32_0 : i32, i32
  }
  func.func @transform_2(%arg0: i32, %arg1: memref<16xi32, #tpu.memory_space<smem>>) -> (i32, i32) {
    %c0_i32 = arith.constant 0 : i32
    %c0_i32_0 = arith.constant 0 : i32
    %c0_i32_1 = arith.constant 0 : i32
    return %c0_i32, %c0_i32_0 : i32, i32
  }
  func.func @transform_3(%arg0: i32, %arg1: memref<16xi32, #tpu.memory_space<smem>>) -> (i32, i32) {
    %c0_i32 = arith.constant 0 : i32
    %c0_i32_0 = arith.constant 0 : i32
    %c0_i32_1 = arith.constant 0 : i32
    return %c0_i32, %c0_i32_0 : i32, i32
  }
  func.func @transform_4(%arg0: i32, %arg1: memref<16xi32, #tpu.memory_space<smem>>) -> (i32, i32) {
    %c0_i32 = arith.constant 0 : i32
    %c0_i32_0 = arith.constant 0 : i32
    %c0_i32_1 = arith.constant 0 : i32
    return %c0_i32, %c0_i32_0 : i32, i32
  }
  func.func @transform_5(%arg0: i32, %arg1: memref<16xi32, #tpu.memory_space<smem>>) -> (i32, i32) {
    %c0_i32 = arith.constant 0 : i32
    %c0_i32_0 = arith.constant 0 : i32
    %c0_i32_1 = arith.constant 0 : i32
    return %c0_i32, %c0_i32_0 : i32, i32
  }
  func.func @transform_6(%arg0: i32, %arg1: memref<16xi32, #tpu.memory_space<smem>>) -> (i32, i32, i32) {
    %c0_i32 = arith.constant 0 : i32
    %c0_i32_0 = arith.constant 0 : i32
    %c0_i32_1 = arith.constant 0 : i32
    %c0_i32_2 = arith.constant 0 : i32
    return %c0_i32, %c0_i32_0, %c0_i32_1 : i32, i32, i32
  }
  func.func @transform_7(%arg0: i32, %arg1: memref<16xi32, #tpu.memory_space<smem>>) -> (i32, i32) {
    %c0_i32 = arith.constant 0 : i32
    %c0_i32_0 = arith.constant 0 : i32
    %c0_i32_1 = arith.constant 0 : i32
    return %c0_i32, %c0_i32_0 : i32, i32
  }
  func.func @transform_8(%arg0: i32, %arg1: memref<16xi32, #tpu.memory_space<smem>>) -> (i32, i32, i32) {
    %c0_i32 = arith.constant 0 : i32
    %c0_i32_0 = arith.constant 0 : i32
    %c0_i32_1 = arith.constant 0 : i32
    %c0_i32_2 = arith.constant 0 : i32
    return %c0_i32, %c0_i32_0, %c0_i32_1 : i32, i32, i32
  }
  func.func @transform_9(%arg0: i32, %arg1: memref<16xi32, #tpu.memory_space<smem>>) -> (i32, i32) {
    %c0_i32 = arith.constant 0 : i32
    %c0_i32_0 = arith.constant 0 : i32
    %c0_i32_1 = arith.constant 0 : i32
    return %c0_i32, %c0_i32_0 : i32, i32
  }
  func.func @transform_10(%arg0: i32, %arg1: memref<16xi32, #tpu.memory_space<smem>>) -> (i32, i32) {
    %c0_i32 = arith.constant 0 : i32
    %c0_i32_0 = arith.constant 0 : i32
    %c0_i32_1 = arith.constant 0 : i32
    return %c0_i32, %c0_i32_0 : i32, i32
  }
  func.func @transform_11(%arg0: i32, %arg1: memref<16xi32, #tpu.memory_space<smem>>) -> (i32, i32) {
    %c0_i32 = arith.constant 0 : i32
    %c0_i32_0 = arith.constant 0 : i32
    %c0_i32_1 = arith.constant 0 : i32
    return %c0_i32, %c0_i32_0 : i32, i32
  }
  func.func @transform_12(%arg0: i32, %arg1: memref<16xi32, #tpu.memory_space<smem>>) -> (i32, i32, i32) {
    %c0_i32 = arith.constant 0 : i32
    %c0_i32_0 = arith.constant 0 : i32
    %c0_i32_1 = arith.constant 0 : i32
    %c0_i32_2 = arith.constant 0 : i32
    return %c0_i32, %c0_i32_0, %c0_i32_1 : i32, i32, i32
  }
  func.func @transform_13(%arg0: i32, %arg1: memref<16xi32, #tpu.memory_space<smem>>) -> (i32, i32) {
    %c0_i32 = arith.constant 0 : i32
    %c0_i32_0 = arith.constant 0 : i32
    %c0_i32_1 = arith.constant 0 : i32
    return %c0_i32, %c0_i32_0 : i32, i32
  }
  func.func @transform_14(%arg0: i32, %arg1: memref<16xi32, #tpu.memory_space<smem>>) -> (i32, i32, i32) {
    %c0_i32 = arith.constant 0 : i32
    %c0_i32_0 = arith.constant 0 : i32
    %c0_i32_1 = arith.constant 0 : i32
    %c0_i32_2 = arith.constant 0 : i32
    return %c0_i32, %c0_i32_0, %c0_i32_1 : i32, i32, i32
  }
  func.func @transform_15(%arg0: i32, %arg1: memref<16xi32, #tpu.memory_space<smem>>) -> (i32, i32) {
    %c0_i32 = arith.constant 0 : i32
    %c0_i32_0 = arith.constant 0 : i32
    %c0_i32_1 = arith.constant 0 : i32
    return %c0_i32, %c0_i32_0 : i32, i32
  }
  func.func @transform_16(%arg0: i32, %arg1: memref<16xi32, #tpu.memory_space<smem>>) -> (i32, i32) {
    %c0_i32 = arith.constant 0 : i32
    %c0_i32_0 = arith.constant 0 : i32
    %c0_i32_1 = arith.constant 0 : i32
    return %c0_i32, %c0_i32_0 : i32, i32
  }
  func.func @transform_17(%arg0: i32, %arg1: memref<16xi32, #tpu.memory_space<smem>>) -> (i32, i32) {
    %c0_i32 = arith.constant 0 : i32
    %c0_i32_0 = arith.constant 0 : i32
    %c0_i32_1 = arith.constant 0 : i32
    return %c0_i32, %c0_i32_0 : i32, i32
  }
  func.func @transform_18(%arg0: i32, %arg1: memref<16xi32, #tpu.memory_space<smem>>) -> (i32, i32, i32) {
    %c0_i32 = arith.constant 0 : i32
    %c0_i32_0 = arith.constant 0 : i32
    %c0_i32_1 = arith.constant 0 : i32
    return %arg0, %c0_i32, %c0_i32_0 : i32, i32, i32
  }
}

</mosaic_0001>

<llo_original>
// kernel: single_sentence_encoder_bert.1
$region0: #{single_sentence_encoder_bert.1}
  #allocation0 [shape = 'u32[]', space=smem, size = 0x4, offset = 0x4, fixed_abs, tag = 'smem constant byte address 0x4 - core index']
  #allocation1 [shape = 'u32[72,128]{1,0:T(1,128)}', space=vmem, size = 0x9000, scoped, tag = 'internal scratch']
  #allocation2 [shape = 'f32[8,32]{1,0:T(8,128)}', space=vmem, size = 0x1000, scoped, tag = 'scratch operand']
  #allocation3 [shape = 's32[1]{0}', space=sflag, size = 0x4, scoped, tag = 'scoped memory for single_sentence_encoder_bert.1']
  #allocation4 [shape = 'u8[512]{0}', space=smem, size = 0x200, scoped, tag = 'prefetched SMEM operand 0']
  %s0 = inlined_call_operand.vmem [shape: s32[16], index: 0, kind: input, shape index: {}]
  %s1 = inlined_call_operand.vmem [shape: f32[2,8], index: 1, kind: input, shape index: {}]
  %s2 = inlined_call_operand.vmem [shape: f32[100,32], index: 2, kind: input, shape index: {}]
  %s3 = inlined_call_operand.vmem [shape: f32[16,32], index: 3, kind: input, shape index: {}]
  %s4 = inlined_call_operand.vmem [shape: f32[2,32], index: 4, kind: input, shape index: {}]
  %s5 = inlined_call_operand.vmem [shape: f32[1,32], index: 5, kind: input, shape index: {}]
  %s6 = inlined_call_operand.vmem [shape: f32[1,32], index: 6, kind: input, shape index: {}]
  %s7 = inlined_call_operand.vmem [shape: bf16[2,32,96], index: 7, kind: input, shape index: {}]
  %s8 = inlined_call_operand.vmem [shape: f32[2,96], index: 8, kind: input, shape index: {}]
  %s9 = inlined_call_operand.vmem [shape: bf16[2,32,32], index: 9, kind: input, shape index: {}]
  %s10 = inlined_call_operand.vmem [shape: f32[2,32], index: 10, kind: input, shape index: {}]
  %s11 = inlined_call_operand.vmem [shape: f32[2,32], index: 11, kind: input, shape index: {}]
  %s12 = inlined_call_operand.vmem [shape: f32[2,32], index: 12, kind: input, shape index: {}]
  %s13 = inlined_call_operand.vmem [shape: bf16[2,32,64], index: 13, kind: input, shape index: {}]
  %s14 = inlined_call_operand.vmem [shape: f32[2,64], index: 14, kind: input, shape index: {}]
  %s15 = inlined_call_operand.vmem [shape: bf16[2,64,32], index: 15, kind: input, shape index: {}]
  %s16 = inlined_call_operand.vmem [shape: f32[2,32], index: 16, kind: input, shape index: {}]
  %s17 = inlined_call_operand.vmem [shape: f32[2,32], index: 17, kind: input, shape index: {}]
  %s18 = inlined_call_operand.vmem [shape: f32[2,32], index: 18, kind: input, shape index: {}]
  %s19 = inlined_call_operand.hbm [shape: f32[2,1,32], index: 19, kind: output, shape index: {}]
  %s20 = sld [smem:[#allocation0]]
  $region105: #{single_sentence_encoder_bert.1} parent=0
    _
  %s22 = ssub.s32 1, %s20
  %s23 = scalar_select 0, %s22, %s20
  %s25 = sshll.u32 %s0, 4
  %s26 = int_to_ptr.vmem [resolvable:$true] %s25
  %28 = dma.vmem_to_smem %s26, 16, [#allocation4], [#allocation3]
  %30 = dma.done [#allocation3], 16
  %31 = sfence
  $region1: #{single_sentence_encoder_bert.1} parent=0
    #allocation5 [shape = 'u8[1024]{0}', space=vmem, size = 0x400, scoped, tag = 'output window, operand 0']
    #allocation6 [shape = 's32[2]{0}', space=sflag, size = 0x8, scoped, tag = 'scoped memory for single_sentence_encoder_bert.1']
    %32 = vsyncpa [#allocation6], 0
    %s33 = scalar_lea.sflag [#allocation6], 1
    %34 = vsyncpa %s33, 0
    loop: start=0, step=1, limit=4
    $region2: #{single_sentence_encoder_bert.1} parent=1 // loop_pre_header
      _
    $region3: #{single_sentence_encoder_bert.1} parent=1 // loop_header
      %s36 = sphi 0, %s40
      %p37 = scmp.ge.s32.totalorder %s36, 4
      %s44 = sphi 0, %s44
      %s46 = sphi 0, %s44
      %s47 = sphi 0, %s46
      %s61 = sphi 0, %s47
      %s65 = sphi 0, %s65
      %s67 = sphi 0, %s65
      %s68 = sphi 0, %s67
      %s82 = sphi 0, %s68
      %s86 = sphi 0, %s86
      %s88 = sphi 0, %s86
      %s89 = sphi 0, %s88
      %s103 = sphi 0, %s89
      %s107 = sphi 0, %s107
      %s109 = sphi 0, %s107
      %s110 = sphi 0, %s109
      %s124 = sphi 0, %s110
      %s128 = sphi 0, %s128
      %s130 = sphi 0, %s128
      %s131 = sphi 0, %s130
      %s145 = sphi 0, %s131
      %s149 = sphi 0, %s149
      %s151 = sphi 0, %s149
      %s152 = sphi 0, %s151
      %s166 = sphi 0, %s152
      %s170 = sphi 0, %s170
      %s172 = sphi 0, %s170
      %s173 = sphi 0, %s172
      %s187 = sphi 0, %s173
      %s191 = sphi 0, %s191
      %s193 = sphi 0, %s191
      %s194 = sphi 0, %s193
      %s208 = sphi 0, %s194
      %s212 = sphi 0, %s212
      %s214 = sphi 0, %s212
      %s215 = sphi 0, %s214
      %s229 = sphi 0, %s215
      %s233 = sphi 0, %s233
      %s235 = sphi 0, %s233
      %s236 = sphi 0, %s235
      %s250 = sphi 0, %s236
      %s254 = sphi 0, %s254
      %s256 = sphi 0, %s254
      %s257 = sphi 0, %s256
      %s271 = sphi 0, %s257
      %s275 = sphi 0, %s275
      %s277 = sphi 0, %s275
      %s278 = sphi 0, %s277
      %s292 = sphi 0, %s278
      %s296 = sphi 0, %s296
      %s298 = sphi 0, %s296
      %s299 = sphi 0, %s298
      %s313 = sphi 0, %s299
      %s317 = sphi 0, %s317
      %s319 = sphi 0, %s317
      %s320 = sphi 0, %s319
      %s334 = sphi 0, %s320
      %s338 = sphi 0, %s338
      %s340 = sphi 0, %s338
      %s341 = sphi 0, %s340
      %s355 = sphi 0, %s341
      %s359 = sphi 0, %s359
      %s361 = sphi 0, %s359
      %s362 = sphi 0, %s361
      %s376 = sphi 0, %s362
      %s380 = sphi 0, %s380
      %s382 = sphi 0, %s380
      %s383 = sphi 0, %s382
      %s397 = sphi 0, %s383
      %s401 = sphi 0, %s401
      %s403 = sphi 0, %s401
      %s404 = sphi 0, %s403
      %s418 = sphi 0, %s404
      %s424 = sphi 0, %s426
      %s427 = sphi 0, %s424
      %s428 = sphi 0, %s427
      %s444 = sphi 0, %s428
    $region4: #{single_sentence_encoder_bert.1} parent=1 // loop_header_branch
      %39 = sbr.rel (%p37) target = $region8
    $region5: #{single_sentence_encoder_bert.1} parent=1 // loop_body
      %s41 = ssub.s32 %s36, 1
      %s42 = ssub.s32 %s36, 2
      %s43 = sadd.s32 %s36, 1
      %s45 = sadd.s32 %s44, 1
      %p48 = scmp.eq.s32.totalorder %s36, 1
      %p49 = scmp.ne.s32.totalorder %s44, %s46
      %p50 = scmp.eq.s32.totalorder %s36, 0
      %p51 = por %p49, %p50
      %p52 = scmp.ne.s32.totalorder %s44, %s46
      %p53 = scmp.eq.s32.totalorder %s41, 1
      %p54 = por %p52, %p53
      %p55 = scmp.ne.s32.totalorder %s46, %s47
      %p56 = scmp.eq.s32.totalorder %s41, 0
      %p57 = por %p55, %p56
      %p58 = scmp.ne.s32.totalorder %s46, %s47
      %p59 = scmp.eq.s32.totalorder %s42, 1
      %p60 = por %p58, %p59
      %p62 = scmp.ne.s32.totalorder %s47, %s61
      %p63 = scmp.eq.s32.totalorder %s42, 0
      %p64 = por %p62, %p63
      %s66 = sadd.s32 %s65, 1
      %p69 = scmp.eq.s32.totalorder %s36, 1
      %p70 = scmp.ne.s32.totalorder %s65, %s67
      %p71 = scmp.eq.s32.totalorder %s36, 0
      %p72 = por %p70, %p71
      %p73 = scmp.ne.s32.totalorder %s65, %s67
      %p74 = scmp.eq.s32.totalorder %s41, 1
      %p75 = por %p73, %p74
      %p76 = scmp.ne.s32.totalorder %s67, %s68
      %p77 = scmp.eq.s32.totalorder %s41, 0
      %p78 = por %p76, %p77
      %p79 = scmp.ne.s32.totalorder %s67, %s68
      %p80 = scmp.eq.s32.totalorder %s42, 1
      %p81 = por %p79, %p80
      %p83 = scmp.ne.s32.totalorder %s68, %s82
      %p84 = scmp.eq.s32.totalorder %s42, 0
      %p85 = por %p83, %p84
      %s87 = sadd.s32 %s86, 1
      %p90 = scmp.eq.s32.totalorder %s36, 1
      %p91 = scmp.ne.s32.totalorder %s86, %s88
      %p92 = scmp.eq.s32.totalorder %s36, 0
      %p93 = por %p91, %p92
      %p94 = scmp.ne.s32.totalorder %s86, %s88
      %p95 = scmp.eq.s32.totalorder %s41, 1
      %p96 = por %p94, %p95
      %p97 = scmp.ne.s32.totalorder %s88, %s89
      %p98 = scmp.eq.s32.totalorder %s41, 0
      %p99 = por %p97, %p98
      %p100 = scmp.ne.s32.totalorder %s88, %s89
      %p101 = scmp.eq.s32.totalorder %s42, 1
      %p102 = por %p100, %p101
      %p104 = scmp.ne.s32.totalorder %s89, %s103
      %p105 = scmp.eq.s32.totalorder %s42, 0
      %p106 = por %p104, %p105
      %s108 = sadd.s32 %s107, 1
      %p111 = scmp.eq.s32.totalorder %s36, 1
      %p112 = scmp.ne.s32.totalorder %s107, %s109
      %p113 = scmp.eq.s32.totalorder %s36, 0
      %p114 = por %p112, %p113
      %p115 = scmp.ne.s32.totalorder %s107, %s109
      %p116 = scmp.eq.s32.totalorder %s41, 1
      %p117 = por %p115, %p116
      %p118 = scmp.ne.s32.totalorder %s109, %s110
      %p119 = scmp.eq.s32.totalorder %s41, 0
      %p120 = por %p118, %p119
      %p121 = scmp.ne.s32.totalorder %s109, %s110
      %p122 = scmp.eq.s32.totalorder %s42, 1
      %p123 = por %p121, %p122
      %p125 = scmp.ne.s32.totalorder %s110, %s124
      %p126 = scmp.eq.s32.totalorder %s42, 0
      %p127 = por %p125, %p126
      %s129 = sadd.s32 %s128, 1
      %p132 = scmp.eq.s32.totalorder %s36, 1
      %p133 = scmp.ne.s32.totalorder %s128, %s130
      %p134 = scmp.eq.s32.totalorder %s36, 0
      %p135 = por %p133, %p134
      %p136 = scmp.ne.s32.totalorder %s128, %s130
      %p137 = scmp.eq.s32.totalorder %s41, 1
      %p138 = por %p136, %p137
      %p139 = scmp.ne.s32.totalorder %s130, %s131
      %p140 = scmp.eq.s32.totalorder %s41, 0
      %p141 = por %p139, %p140
      %p142 = scmp.ne.s32.totalorder %s130, %s131
      %p143 = scmp.eq.s32.totalorder %s42, 1
      %p144 = por %p142, %p143
      %p146 = scmp.ne.s32.totalorder %s131, %s145
      %p147 = scmp.eq.s32.totalorder %s42, 0
      %p148 = por %p146, %p147
      %s150 = sadd.s32 %s149, 1
      %p153 = scmp.eq.s32.totalorder %s36, 1
      %p154 = scmp.ne.s32.totalorder %s149, %s151
      %p155 = scmp.eq.s32.totalorder %s36, 0
      %p156 = por %p154, %p155
      %p157 = scmp.ne.s32.totalorder %s149, %s151
      %p158 = scmp.eq.s32.totalorder %s41, 1
      %p159 = por %p157, %p158
      %p160 = scmp.ne.s32.totalorder %s151, %s152
      %p161 = scmp.eq.s32.totalorder %s41, 0
      %p162 = por %p160, %p161
      %p163 = scmp.ne.s32.totalorder %s151, %s152
      %p164 = scmp.eq.s32.totalorder %s42, 1
      %p165 = por %p163, %p164
      %p167 = scmp.ne.s32.totalorder %s152, %s166
      %p168 = scmp.eq.s32.totalorder %s42, 0
      %p169 = por %p167, %p168
      %s171 = sadd.s32 %s170, 1
      %p174 = scmp.eq.s32.totalorder %s36, 1
      %p175 = scmp.ne.s32.totalorder %s170, %s172
      %p176 = scmp.eq.s32.totalorder %s36, 0
      %p177 = por %p175, %p176
      %p178 = scmp.ne.s32.totalorder %s170, %s172
      %p179 = scmp.eq.s32.totalorder %s41, 1
      %p180 = por %p178, %p179
      %p181 = scmp.ne.s32.totalorder %s172, %s173
      %p182 = scmp.eq.s32.totalorder %s41, 0
      %p183 = por %p181, %p182
      %p184 = scmp.ne.s32.totalorder %s172, %s173
      %p185 = scmp.eq.s32.totalorder %s42, 1
      %p186 = por %p184, %p185
      %p188 = scmp.ne.s32.totalorder %s173, %s187
      %p189 = scmp.eq.s32.totalorder %s42, 0
      %p190 = por %p188, %p189
      %s192 = sadd.s32 %s191, 1
      %p195 = scmp.eq.s32.totalorder %s36, 1
      %p196 = scmp.ne.s32.totalorder %s191, %s193
      %p197 = scmp.eq.s32.totalorder %s36, 0
      %p198 = por %p196, %p197
      %p199 = scmp.ne.s32.totalorder %s191, %s193
      %p200 = scmp.eq.s32.totalorder %s41, 1
      %p201 = por %p199, %p200
      %p202 = scmp.ne.s32.totalorder %s193, %s194
      %p203 = scmp.eq.s32.totalorder %s41, 0
      %p204 = por %p202, %p203
      %p205 = scmp.ne.s32.totalorder %s193, %s194
      %p206 = scmp.eq.s32.totalorder %s42, 1
      %p207 = por %p205, %p206
      %p209 = scmp.ne.s32.totalorder %s194, %s208
      %p210 = scmp.eq.s32.totalorder %s42, 0
      %p211 = por %p209, %p210
      %s213 = sadd.s32 %s212, 1
      %p216 = scmp.eq.s32.totalorder %s36, 1
      %p217 = scmp.ne.s32.totalorder %s212, %s214
      %p218 = scmp.eq.s32.totalorder %s36, 0
      %p219 = por %p217, %p218
      %p220 = scmp.ne.s32.totalorder %s212, %s214
      %p221 = scmp.eq.s32.totalorder %s41, 1
      %p222 = por %p220, %p221
      %p223 = scmp.ne.s32.totalorder %s214, %s215
      %p224 = scmp.eq.s32.totalorder %s41, 0
      %p225 = por %p223, %p224
      %p226 = scmp.ne.s32.totalorder %s214, %s215
      %p227 = scmp.eq.s32.totalorder %s42, 1
      %p228 = por %p226, %p227
      %p230 = scmp.ne.s32.totalorder %s215, %s229
      %p231 = scmp.eq.s32.totalorder %s42, 0
      %p232 = por %p230, %p231
      %s234 = sadd.s32 %s233, 1
      %p237 = scmp.eq.s32.totalorder %s36, 1
      %p238 = scmp.ne.s32.totalorder %s233, %s235
      %p239 = scmp.eq.s32.totalorder %s36, 0
      %p240 = por %p238, %p239
      %p241 = scmp.ne.s32.totalorder %s233, %s235
      %p242 = scmp.eq.s32.totalorder %s41, 1
      %p243 = por %p241, %p242
      %p244 = scmp.ne.s32.totalorder %s235, %s236
      %p245 = scmp.eq.s32.totalorder %s41, 0
      %p246 = por %p244, %p245
      %p247 = scmp.ne.s32.totalorder %s235, %s236
      %p248 = scmp.eq.s32.totalorder %s42, 1
      %p249 = por %p247, %p248
      %p251 = scmp.ne.s32.totalorder %s236, %s250
      %p252 = scmp.eq.s32.totalorder %s42, 0
      %p253 = por %p251, %p252
      %s255 = sadd.s32 %s254, 1
      %p258 = scmp.eq.s32.totalorder %s36, 1
      %p259 = scmp.ne.s32.totalorder %s254, %s256
      %p260 = scmp.eq.s32.totalorder %s36, 0
      %p261 = por %p259, %p260
      %p262 = scmp.ne.s32.totalorder %s254, %s256
      %p263 = scmp.eq.s32.totalorder %s41, 1
      %p264 = por %p262, %p263
      %p265 = scmp.ne.s32.totalorder %s256, %s257
      %p266 = scmp.eq.s32.totalorder %s41, 0
      %p267 = por %p265, %p266
      %p268 = scmp.ne.s32.totalorder %s256, %s257
      %p269 = scmp.eq.s32.totalorder %s42, 1
      %p270 = por %p268, %p269
      %p272 = scmp.ne.s32.totalorder %s257, %s271
      %p273 = scmp.eq.s32.totalorder %s42, 0
      %p274 = por %p272, %p273
      %s276 = sadd.s32 %s275, 1
      %p279 = scmp.eq.s32.totalorder %s36, 1
      %p280 = scmp.ne.s32.totalorder %s275, %s277
      %p281 = scmp.eq.s32.totalorder %s36, 0
      %p282 = por %p280, %p281
      %p283 = scmp.ne.s32.totalorder %s275, %s277
      %p284 = scmp.eq.s32.totalorder %s41, 1
      %p285 = por %p283, %p284
      %p286 = scmp.ne.s32.totalorder %s277, %s278
      %p287 = scmp.eq.s32.totalorder %s41, 0
      %p288 = por %p286, %p287
      %p289 = scmp.ne.s32.totalorder %s277, %s278
      %p290 = scmp.eq.s32.totalorder %s42, 1
      %p291 = por %p289, %p290
      %p293 = scmp.ne.s32.totalorder %s278, %s292
      %p294 = scmp.eq.s32.totalorder %s42, 0
      %p295 = por %p293, %p294
      %s297 = sadd.s32 %s296, 1
      %p300 = scmp.eq.s32.totalorder %s36, 1
      %p301 = scmp.ne.s32.totalorder %s296, %s298
      %p302 = scmp.eq.s32.totalorder %s36, 0
      %p303 = por %p301, %p302
      %p304 = scmp.ne.s32.totalorder %s296, %s298
      %p305 = scmp.eq.s32.totalorder %s41, 1
      %p306 = por %p304, %p305
      %p307 = scmp.ne.s32.totalorder %s298, %s299
      %p308 = scmp.eq.s32.totalorder %s41, 0
      %p309 = por %p307, %p308
      %p310 = scmp.ne.s32.totalorder %s298, %s299
      %p311 = scmp.eq.s32.totalorder %s42, 1
      %p312 = por %p310, %p311
      %p314 = scmp.ne.s32.totalorder %s299, %s313
      %p315 = scmp.eq.s32.totalorder %s42, 0
      %p316 = por %p314, %p315
      %s318 = sadd.s32 %s317, 1
      %p321 = scmp.eq.s32.totalorder %s36, 1
      %p322 = scmp.ne.s32.totalorder %s317, %s319
      %p323 = scmp.eq.s32.totalorder %s36, 0
      %p324 = por %p322, %p323
      %p325 = scmp.ne.s32.totalorder %s317, %s319
      %p326 = scmp.eq.s32.totalorder %s41, 1
      %p327 = por %p325, %p326
      %p328 = scmp.ne.s32.totalorder %s319, %s320
      %p329 = scmp.eq.s32.totalorder %s41, 0
      %p330 = por %p328, %p329
      %p331 = scmp.ne.s32.totalorder %s319, %s320
      %p332 = scmp.eq.s32.totalorder %s42, 1
      %p333 = por %p331, %p332
      %p335 = scmp.ne.s32.totalorder %s320, %s334
      %p336 = scmp.eq.s32.totalorder %s42, 0
      %p337 = por %p335, %p336
      %s339 = sadd.s32 %s338, 1
      %p342 = scmp.eq.s32.totalorder %s36, 1
      %p343 = scmp.ne.s32.totalorder %s338, %s340
      %p344 = scmp.eq.s32.totalorder %s36, 0
      %p345 = por %p343, %p344
      %p346 = scmp.ne.s32.totalorder %s338, %s340
      %p347 = scmp.eq.s32.totalorder %s41, 1
      %p348 = por %p346, %p347
      %p349 = scmp.ne.s32.totalorder %s340, %s341
      %p350 = scmp.eq.s32.totalorder %s41, 0
      %p351 = por %p349, %p350
      %p352 = scmp.ne.s32.totalorder %s340, %s341
      %p353 = scmp.eq.s32.totalorder %s42, 1
      %p354 = por %p352, %p353
      %p356 = scmp.ne.s32.totalorder %s341, %s355
      %p357 = scmp.eq.s32.totalorder %s42, 0
      %p358 = por %p356, %p357
      %s360 = sadd.s32 %s359, 1
      %p363 = scmp.eq.s32.totalorder %s36, 1
      %p364 = scmp.ne.s32.totalorder %s359, %s361
      %p365 = scmp.eq.s32.totalorder %s36, 0
      %p366 = por %p364, %p365
      %p367 = scmp.ne.s32.totalorder %s359, %s361
      %p368 = scmp.eq.s32.totalorder %s41, 1
      %p369 = por %p367, %p368
      %p370 = scmp.ne.s32.totalorder %s361, %s362
      %p371 = scmp.eq.s32.totalorder %s41, 0
      %p372 = por %p370, %p371
      %p373 = scmp.ne.s32.totalorder %s361, %s362
      %p374 = scmp.eq.s32.totalorder %s42, 1
      %p375 = por %p373, %p374
      %p377 = scmp.ne.s32.totalorder %s362, %s376
      %p378 = scmp.eq.s32.totalorder %s42, 0
      %p379 = por %p377, %p378
      %s381 = sadd.s32 %s380, 1
      %p384 = scmp.eq.s32.totalorder %s36, 1
      %p385 = scmp.ne.s32.totalorder %s380, %s382
      %p386 = scmp.eq.s32.totalorder %s36, 0
      %p387 = por %p385, %p386
      %p388 = scmp.ne.s32.totalorder %s380, %s382
      %p389 = scmp.eq.s32.totalorder %s41, 1
      %p390 = por %p388, %p389
      %p391 = scmp.ne.s32.totalorder %s382, %s383
      %p392 = scmp.eq.s32.totalorder %s41, 0
      %p393 = por %p391, %p392
      %p394 = scmp.ne.s32.totalorder %s382, %s383
      %p395 = scmp.eq.s32.totalorder %s42, 1
      %p396 = por %p394, %p395
      %p398 = scmp.ne.s32.totalorder %s383, %s397
      %p399 = scmp.eq.s32.totalorder %s42, 0
      %p400 = por %p398, %p399
      %s402 = sadd.s32 %s401, 1
      %p405 = scmp.eq.s32.totalorder %s36, 1
      %p406 = scmp.ne.s32.totalorder %s401, %s403
      %p407 = scmp.eq.s32.totalorder %s36, 0
      %p408 = por %p406, %p407
      %p409 = scmp.ne.s32.totalorder %s401, %s403
      %p410 = scmp.eq.s32.totalorder %s41, 1
      %p411 = por %p409, %p410
      %p412 = scmp.ne.s32.totalorder %s403, %s404
      %p413 = scmp.eq.s32.totalorder %s41, 0
      %p414 = por %p412, %p413
      %p415 = scmp.ne.s32.totalorder %s403, %s404
      %p416 = scmp.eq.s32.totalorder %s42, 1
      %p417 = por %p415, %p416
      %p419 = scmp.ne.s32.totalorder %s404, %s418
      %p420 = scmp.eq.s32.totalorder %s42, 0
      %p421 = por %p419, %p420
      %s422 = ssub.s32 %s36, %s43
      %p423 = scmp.eq.s32.totalorder %s422, 0
      %s425 = sadd.s32 %s424, 1
      %s426 = scalar_select %p423, %s424, %s425
      %p429 = pneg %p423
      %p430 = scmp.eq.s32.totalorder %s36, 1
      %p431 = por %p429, %p430
      %p432 = scmp.ne.s32.totalorder %s424, %s427
      %p433 = scmp.eq.s32.totalorder %s36, 0
      %p434 = por %p432, %p433
      %p435 = scmp.ne.s32.totalorder %s424, %s427
      %p436 = scmp.eq.s32.totalorder %s41, 1
      %p437 = por %p435, %p436
      %p438 = scmp.ne.s32.totalorder %s427, %s428
      %p439 = scmp.eq.s32.totalorder %s41, 0
      %p440 = por %p438, %p439
      %p441 = scmp.ne.s32.totalorder %s427, %s428
      %p442 = scmp.eq.s32.totalorder %s42, 1
      %p443 = por %p441, %p442
      %p445 = scmp.ne.s32.totalorder %s428, %s444
      %p446 = scmp.eq.s32.totalorder %s42, 0
      %p447 = por %p445, %p446
      %p448 = scmp.le.s32.totalorder 1, %s36
      %p449 = scmp.lt.s32.totalorder %s36, 3
      %p450 = pnand %p448, %p449
      %p451 = pneg %p450
      // Predicated region
      $region9: #{single_sentence_encoder_bert.1} parent=5 // pred_check
        _
      $region10: #{single_sentence_encoder_bert.1} parent=5 // pred_check_branch
        %453 = sbr.rel (%p450) target = $region12
      $region11: #{single_sentence_encoder_bert.1} parent=5 // pred_region
        %s454 = ssub.s32 %s36, 1
        // Predicated region
        $region13: #{single_sentence_encoder_bert.1} parent=11 // pred_check
          %p455 = pneg %p57
        $region14: #{single_sentence_encoder_bert.1} parent=11 // pred_check_branch
          %457 = sbr.rel (%p455) target = $region16
        $region15: #{single_sentence_encoder_bert.1} parent=11 // pred_region
          _
        $region16: #{single_sentence_encoder_bert.1} parent=11 // pred_fallthru
          _
        // Predicated region
        $region17: #{single_sentence_encoder_bert.1} parent=11 // pred_check
          %p458 = pneg %p78
        $region18: #{single_sentence_encoder_bert.1} parent=11 // pred_check_branch
          %460 = sbr.rel (%p458) target = $region20
        $region19: #{single_sentence_encoder_bert.1} parent=11 // pred_region
          _
        $region20: #{single_sentence_encoder_bert.1} parent=11 // pred_fallthru
          _
        // Predicated region
        $region21: #{single_sentence_encoder_bert.1} parent=11 // pred_check
          %p461 = pneg %p99
        $region22: #{single_sentence_encoder_bert.1} parent=11 // pred_check_branch
          %463 = sbr.rel (%p461) target = $region24
        $region23: #{single_sentence_encoder_bert.1} parent=11 // pred_region
          _
        $region24: #{single_sentence_encoder_bert.1} parent=11 // pred_fallthru
          _
        // Predicated region
        $region25: #{single_sentence_encoder_bert.1} parent=11 // pred_check
          %p464 = pneg %p120
        $region26: #{single_sentence_encoder_bert.1} parent=11 // pred_check_branch
          %466 = sbr.rel (%p464) target = $region28
        $region27: #{single_sentence_encoder_bert.1} parent=11 // pred_region
          _
        $region28: #{single_sentence_encoder_bert.1} parent=11 // pred_fallthru
          _
        // Predicated region
        $region29: #{single_sentence_encoder_bert.1} parent=11 // pred_check
          %p467 = pneg %p141
        $region30: #{single_sentence_encoder_bert.1} parent=11 // pred_check_branch
          %469 = sbr.rel (%p467) target = $region32
        $region31: #{single_sentence_encoder_bert.1} parent=11 // pred_region
          _
        $region32: #{single_sentence_encoder_bert.1} parent=11 // pred_fallthru
          _
        // Predicated region
        $region33: #{single_sentence_encoder_bert.1} parent=11 // pred_check
          %p470 = pneg %p162
        $region34: #{single_sentence_encoder_bert.1} parent=11 // pred_check_branch
          %472 = sbr.rel (%p470) target = $region36
        $region35: #{single_sentence_encoder_bert.1} parent=11 // pred_region
          _
        $region36: #{single_sentence_encoder_bert.1} parent=11 // pred_fallthru
          _
        // Predicated region
        $region37: #{single_sentence_encoder_bert.1} parent=11 // pred_check
          %p473 = pneg %p183
        $region38: #{single_sentence_encoder_bert.1} parent=11 // pred_check_branch
          %475 = sbr.rel (%p473) target = $region40
        $region39: #{single_sentence_encoder_bert.1} parent=11 // pred_region
          _
        $region40: #{single_sentence_encoder_bert.1} parent=11 // pred_fallthru
          _
        // Predicated region
        $region41: #{single_sentence_encoder_bert.1} parent=11 // pred_check
          %p476 = pneg %p204
        $region42: #{single_sentence_encoder_bert.1} parent=11 // pred_check_branch
          %478 = sbr.rel (%p476) target = $region44
        $region43: #{single_sentence_encoder_bert.1} parent=11 // pred_region
          _
        $region44: #{single_sentence_encoder_bert.1} parent=11 // pred_fallthru
          _
        // Predicated region
        $region45: #{single_sentence_encoder_bert.1} parent=11 // pred_check
          %p479 = pneg %p225
        $region46: #{single_sentence_encoder_bert.1} parent=11 // pred_check_branch
          %481 = sbr.rel (%p479) target = $region48
        $region47: #{single_sentence_encoder_bert.1} parent=11 // pred_region
          _
        $region48: #{single_sentence_encoder_bert.1} parent=11 // pred_fallthru
          _
        // Predicated region
        $region49: #{single_sentence_encoder_bert.1} parent=11 // pred_check
          %p482 = pneg %p246
        $region50: #{single_sentence_encoder_bert.1} parent=11 // pred_check_branch
          %484 = sbr.rel (%p482) target = $region52
        $region51: #{single_sentence_encoder_bert.1} parent=11 // pred_region
          _
        $region52: #{single_sentence_encoder_bert.1} parent=11 // pred_fallthru
          _
        // Predicated region
        $region53: #{single_sentence_encoder_bert.1} parent=11 // pred_check
          %p485 = pneg %p267
        $region54: #{single_sentence_encoder_bert.1} parent=11 // pred_check_branch
          %487 = sbr.rel (%p485) target = $region56
        $region55: #{single_sentence_encoder_bert.1} parent=11 // pred_region
          _
        $region56: #{single_sentence_encoder_bert.1} parent=11 // pred_fallthru
          _
        // Predicated region
        $region57: #{single_sentence_encoder_bert.1} parent=11 // pred_check
          %p488 = pneg %p288
        $region58: #{single_sentence_encoder_bert.1} parent=11 // pred_check_branch
          %490 = sbr.rel (%p488) target = $region60
        $region59: #{single_sentence_encoder_bert.1} parent=11 // pred_region
          _
        $region60: #{single_sentence_encoder_bert.1} parent=11 // pred_fallthru
          _
        // Predicated region
        $region61: #{single_sentence_encoder_bert.1} parent=11 // pred_check
          %p491 = pneg %p309
        $region62: #{single_sentence_encoder_bert.1} parent=11 // pred_check_branch
          %493 = sbr.rel (%p491) target = $region64
        $region63: #{single_sentence_encoder_bert.1} parent=11 // pred_region
          _
        $region64: #{single_sentence_encoder_bert.1} parent=11 // pred_fallthru
          _
        // Predicated region
        $region65: #{single_sentence_encoder_bert.1} parent=11 // pred_check
          %p494 = pneg %p330
        $region66: #{single_sentence_encoder_bert.1} parent=11 // pred_check_branch
          %496 = sbr.rel (%p494) target = $region68
        $region67: #{single_sentence_encoder_bert.1} parent=11 // pred_region
          _
        $region68: #{single_sentence_encoder_bert.1} parent=11 // pred_fallthru
          _
        // Predicated region
        $region69: #{single_sentence_encoder_bert.1} parent=11 // pred_check
          %p497 = pneg %p351
        $region70: #{single_sentence_encoder_bert.1} parent=11 // pred_check_branch
          %499 = sbr.rel (%p497) target = $region72
        $region71: #{single_sentence_encoder_bert.1} parent=11 // pred_region
          _
        $region72: #{single_sentence_encoder_bert.1} parent=11 // pred_fallthru
          _
        // Predicated region
        $region73: #{single_sentence_encoder_bert.1} parent=11 // pred_check
          %p500 = pneg %p372
        $region74: #{single_sentence_encoder_bert.1} parent=11 // pred_check_branch
          %502 = sbr.rel (%p500) target = $region76
        $region75: #{single_sentence_encoder_bert.1} parent=11 // pred_region
          _
        $region76: #{single_sentence_encoder_bert.1} parent=11 // pred_fallthru
          _
        // Predicated region
        $region77: #{single_sentence_encoder_bert.1} parent=11 // pred_check
          %p503 = pneg %p393
        $region78: #{single_sentence_encoder_bert.1} parent=11 // pred_check_branch
          %505 = sbr.rel (%p503) target = $region80
        $region79: #{single_sentence_encoder_bert.1} parent=11 // pred_region
          _
        $region80: #{single_sentence_encoder_bert.1} parent=11 // pred_fallthru
          _
        // Predicated region
        $region81: #{single_sentence_encoder_bert.1} parent=11 // pred_check
          %p506 = pneg %p414
        $region82: #{single_sentence_encoder_bert.1} parent=11 // pred_check_branch
          %508 = sbr.rel (%p506) target = $region84
        $region83: #{single_sentence_encoder_bert.1} parent=11 // pred_region
          _
        $region84: #{single_sentence_encoder_bert.1} parent=11 // pred_fallthru
          _
      $region12: #{single_sentence_encoder_bert.1} parent=5 // pred_fallthru
        _
      %p509 = scmp.lt.s32.totalorder %s36, 2
      // Predicated region
      $region85: #{single_sentence_encoder_bert.1} parent=5 // pred_check
        %p510 = pneg %p509
      $region86: #{single_sentence_encoder_bert.1} parent=5 // pred_check_branch
        %512 = sbr.rel (%p510) target = $region88
      $region87: #{single_sentence_encoder_bert.1} parent=5 // pred_region
        _
      $region88: #{single_sentence_encoder_bert.1} parent=5 // pred_fallthru
        _
      %p513 = scmp.le.s32.totalorder 1, %s36
      %p514 = scmp.lt.s32.totalorder %s36, 3
      %p515 = pnand %p513, %p514
      %p516 = pneg %p515
      // Predicated region
      $region89: #{single_sentence_encoder_bert.1} parent=5 // pred_check
        _
      $region90: #{single_sentence_encoder_bert.1} parent=5 // pred_check_branch
        %518 = sbr.rel (%p515) target = $region92
      $region91: #{single_sentence_encoder_bert.1} parent=5 // pred_region
        %s519 = ssub.s32 %s36, 1
        %p520 = pneg %p57
        %p521 = pneg %p54
        %p522 = pneg %p78
        %p523 = pneg %p75
        %p524 = pneg %p99
        %p525 = pneg %p96
        %p526 = pneg %p120
        %p527 = pneg %p117
        %p528 = pneg %p141
        %p529 = pneg %p138
        %p530 = pneg %p162
        %p531 = pneg %p159
        %p532 = pneg %p183
        %p533 = pneg %p180
        %p534 = pneg %p204
        %p535 = pneg %p201
        %p536 = pneg %p225
        %p537 = pneg %p222
        %p538 = pneg %p246
        %p539 = pneg %p243
        %p540 = pneg %p267
        %p541 = pneg %p264
        %p542 = pneg %p288
        %p543 = pneg %p285
        %p544 = pneg %p309
        %p545 = pneg %p306
        %p546 = pneg %p330
        %p547 = pneg %p327
        %p548 = pneg %p351
        %p549 = pneg %p348
        %p550 = pneg %p372
        %p551 = pneg %p369
        %p552 = pneg %p393
        %p553 = pneg %p390
        %p554 = pneg %p414
        %p555 = pneg %p411
        %p556 = pneg %p440
        %p557 = pneg %p437
        %s558 = sand.u32 %s427, 1
        %s559 = scalar_lea.sflag [#allocation6], %s558
        %s560 = sand.u32 %s427, 1
        %s561 = scalar_lea.vmem [#allocation5], %s560
        %v563 = vld [vmem:[%s4] sm:$0x1]
        %s564 = smul.u32 %s41, 8
        %s565 = sld [smem:[#allocation4 + %s564]]
        %s566 = scalar_lea.vmem %s2, %s565
        %v567 = vld [vmem:[%s566] sm:$0x1]
        %v568 = vld [vmem:[%s3] sm:$0x1]
        %v569 = vadd.f32 %v567, %v568
        %v570 = vadd.f32 %v569, %v563
        %vm571 = vcmask 253952
        %572 = vst.msk [vmem:[#allocation2] sm:$0x1] %vm571, %v570
        %s573 = sadd.s32 %s564, 1
        %s574 = sld [smem:[#allocation4 + %s573]]
        %s575 = scalar_lea.vmem %s2, %s574
        %v576 = vld [vmem:[%s575] sm:$0x1]
        %v577 = vld [vmem:[%s3 + $0x1] sm:$0x1]
        %v578 = vadd.f32 %v576, %v577
        %v579 = vadd.f32 %v578, %v563
        %580 = vst.msk [vmem:[#allocation2 + $0x1] sm:$0x1] %vm571, %v579
        %s581 = sadd.s32 %s564, 2
        %s582 = sld [smem:[#allocation4 + %s581]]
        %s583 = scalar_lea.vmem %s2, %s582
        %v584 = vld [vmem:[%s583] sm:$0x1]
        %v585 = vld [vmem:[%s3 + $0x2] sm:$0x1]
        %v586 = vadd.f32 %v584, %v585
        %v587 = vadd.f32 %v586, %v563
        %588 = vst.msk [vmem:[#allocation2 + $0x2] sm:$0x1] %vm571, %v587
        %s589 = sadd.s32 %s564, 3
        %s590 = sld [smem:[#allocation4 + %s589]]
        %s591 = scalar_lea.vmem %s2, %s590
        %v592 = vld [vmem:[%s591] sm:$0x1]
        %v593 = vld [vmem:[%s3 + $0x3] sm:$0x1]
        %v594 = vadd.f32 %v592, %v593
        %v595 = vadd.f32 %v594, %v563
        %596 = vst.msk [vmem:[#allocation2 + $0x3] sm:$0x1] %vm571, %v595
        %s597 = sadd.s32 %s564, 4
        %s598 = sld [smem:[#allocation4 + %s597]]
        %s599 = scalar_lea.vmem %s2, %s598
        %v600 = vld [vmem:[%s599] sm:$0x1]
        %v601 = vld [vmem:[%s3 + $0x4] sm:$0x1]
        %v602 = vadd.f32 %v600, %v601
        %v603 = vadd.f32 %v602, %v563
        %604 = vst.msk [vmem:[#allocation2 + $0x4] sm:$0x1] %vm571, %v603
        %s605 = sadd.s32 %s564, 5
        %s606 = sld [smem:[#allocation4 + %s605]]
        %s607 = scalar_lea.vmem %s2, %s606
        %v608 = vld [vmem:[%s607] sm:$0x1]
        %v609 = vld [vmem:[%s3 + $0x5] sm:$0x1]
        %v610 = vadd.f32 %v608, %v609
        %v611 = vadd.f32 %v610, %v563
        %612 = vst.msk [vmem:[#allocation2 + $0x5] sm:$0x1] %vm571, %v611
        %s613 = sadd.s32 %s564, 6
        %s614 = sld [smem:[#allocation4 + %s613]]
        %s615 = scalar_lea.vmem %s2, %s614
        %v616 = vld [vmem:[%s615] sm:$0x1]
        %v617 = vld [vmem:[%s3 + $0x6] sm:$0x1]
        %v618 = vadd.f32 %v616, %v617
        %v619 = vadd.f32 %v618, %v563
        %620 = vst.msk [vmem:[#allocation2 + $0x6] sm:$0x1] %vm571, %v619
        %s621 = sadd.s32 %s564, 7
        %s622 = sld [smem:[#allocation4 + %s621]]
        %s623 = scalar_lea.vmem %s2, %s622
        %v624 = vld [vmem:[%s623] sm:$0x1]
        %v625 = vld [vmem:[%s3 + $0x7] sm:$0x1]
        %v626 = vadd.f32 %v624, %v625
        %v627 = vadd.f32 %v626, %v563
        %628 = vst.msk [vmem:[#allocation2 + $0x7] sm:$0x1] %vm571, %v627
        %v629 = vld [vmem:[#allocation2] sm:$0xff]
        %v630 = vld [vmem:[%s5] sm:$0x1]
        %v631 = vld [vmem:[%s6] sm:$0x1]
        %vm632 = vcmask 261120
        %v633 = vsel %vm632, %v629, 0.0
        %634 = vadd.xlane.f32.xlu0 %v633
        %v635 = vpop.xlane.xlu0 %634
        %v636 = vrcp.pop 32.0
        %v637 = vmul.f32 32.0, %v636
        %v638 = vsub.f32 1.0, %v637
        %v639 = vmul.f32 %v636, %v638
        %v640 = vadd.f32 %v636, %v639
        %vm641 = vweird.f32 %v636
        %v642 = vsel %vm641, %v636, %v640
        %v643 = vmul.f32 %v635, %v642
        %v644 = vsub.f32 %v629, %v643
        %v645 = vmul.f32 %v644, %v644
        %v646 = vsel %vm632, %v645, 0.0
        %647 = vadd.xlane.f32.xlu0 %v646
        %v648 = vpop.xlane.xlu0 %647
        %v649 = vmul.f32 %v648, %v642
        %v650 = vadd.f32 %v649, 1e-12
        %v651 = vrsqrt.pop %v650
        %v652 = vmul.f32 %v651, %v650
        %v653 = vmul.f32 %v652, %v651
        %v654 = vmul.f32 0.5, %v653
        %v655 = vsub.f32 1.5, %v654
        %v656 = vmul.f32 %v651, %v655
        %vm657 = vweird.f32 %v650
        %vm658 = vweird.f32 %v651
        %vm659 = vmor %vm657, %vm658
        %v660 = vsel %vm659, %v651, %v656
        %v661 = vmul.f32 %v644, %v660
        %v663 = vperm.slane %v630, 0
        %v665 = vmul.f32 %v661, %v663
        %v667 = vperm.slane %v631, 0
        %v669 = vadd.f32 %v665, %v667
        %s670 = scalar_lea.vmem %s1, %s41
        %v671 = vld [vmem:[%s670] sm:$0x1]
        %v672 = vsub.f32 1.0, %v671
        %v673 = vmul.f32 %v672, -1e+09
        %v674 = vpack.c.bf16 %v669, %v669
        %v675 = vld [vmem:[%s7] sm:$0xf]
        %v676 = vld [vmem:[%s7 + $0x4] sm:$0xf]
        %v677 = vld [vmem:[%s7 + $0x8] sm:$0xf]
        %v678 = vld [vmem:[%s7 + $0xc] sm:$0xf]
        %v679 = vld [vmem:[%s8] sm:$0x1]
        %v680 = vperm.slane %v679, 0
        %v685 = vunpack.c.l.b16 %v675
        %v686 = vunpack.c.l.b16 %v676
        %v687 = vunpack.c.l.b16 %v677
        %v688 = vunpack.c.l.b16 %v678
        %v689 = vpack.c.b16 %v686, %v685
        %v690 = vpack.c.b16 %v688, %v687
        %v694 = vsel %vm632, %v674, 0
        %696 = vmatpush.bf16.msra.mxu0 0
        %697 = vmatpush.bf16.msra.mxu0 0
        %698 = vmatpush.bf16.msra.mxu0 0
        %699 = vmatpush.bf16.msra.mxu0 0
        %700 = vmatpush.bf16.msra.mxu0 0
        %701 = vmatpush.bf16.msra.mxu0 0
        %702 = vmatpush.bf16.msra.mxu0 %v690
        %703 = vmatpush.bf16.msra.mxu0 %v689
        %704 = vmatmul.bf16.gmra.mxu0 %v694
        %v705 = vpop.f32.mrf.mxu0
        %v706 = vadd.f32 %v680, %v705
        %v707 = vpop.f32.mrf.mxu0
        %708 = vdwg.mxu0
        %710 = vrot.lane.b32.xlu0 %v706, 120
        %v711 = vpop.permute.xlu0 %710
        %713 = vrot.lane.b32.xlu0 %v706, 112
        %v714 = vpop.permute.xlu0 %713
        %716 = vrot.lane.b32.xlu0 %v706, 104
        %v717 = vpop.permute.xlu0 %716
        %v719 = vpack.c.bf16 %v706, %v706
        %v720 = vpack.c.bf16 %v711, %v711
        %v721 = vpack.c.bf16 %v714, %v714
        %v722 = vpack.c.bf16 %v717, %v717
        %v724 = vunpack.c.l.b16 %v719
        %v725 = vpack.c.b16 %v724, %v724
        %726 = vrot.lane.b32.xlu0 %v725, 96
        %v727 = vpop.permute.xlu0 %726
        %vm728 = vcmask 64512
        %v730 = vsel %vm728, %v719, 0
        %v733 = vsel %vm728, %v727, 0
        %735 = vmatpush.bf16.xpose.msra.mxu0 0
        %736 = vmatpush.bf16.xpose.msra.mxu0 0
        %737 = vmatpush.bf16.xpose.msra.mxu0 0
        %738 = vmatpush.bf16.xpose.msra.mxu0 0
        %739 = vmatpush.bf16.xpose.msra.mxu0 0
        %740 = vmatpush.bf16.xpose.msra.mxu0 0
        %741 = vmatpush.bf16.xpose.msra.mxu0 0
        %742 = vmatpush.bf16.xpose.msra.mxu0 %v733
        %743 = vmatmul.bf16.gmra.mxu0 %v730
        %v744 = vpop.f32.mrf.mxu0
        %v745 = vadd.f32 0.0, %v744
        %v746 = vpop.f32.mrf.mxu0
        %747 = vdwg.mxu0
        %v749 = vunpack.c.l.b16 %v720
        %v750 = vpack.c.b16 %v749, %v749
        %751 = vrot.lane.b32.xlu0 %v750, 96
        %v752 = vpop.permute.xlu0 %751
        %v754 = vsel %vm728, %v720, 0
        %v757 = vsel %vm728, %v752, 0
        %759 = vmatpush.bf16.xpose.msra.mxu0 0
        %760 = vmatpush.bf16.xpose.msra.mxu0 0
        %761 = vmatpush.bf16.xpose.msra.mxu0 0
        %762 = vmatpush.bf16.xpose.msra.mxu0 0
        %763 = vmatpush.bf16.xpose.msra.mxu0 0
        %764 = vmatpush.bf16.xpose.msra.mxu0 0
        %765 = vmatpush.bf16.xpose.msra.mxu0 0
        %766 = vmatpush.bf16.xpose.msra.mxu0 %v757
        %767 = vmatmul.bf16.gmra.mxu0 %v754
        %v768 = vpop.f32.mrf.mxu0
        %v769 = vadd.f32 0.0, %v768
        %v770 = vpop.f32.mrf.mxu0
        %771 = vdwg.mxu0
        %v773 = vunpack.c.l.b16 %v721
        %v774 = vpack.c.b16 %v773, %v773
        %775 = vrot.lane.b32.xlu0 %v774, 96
        %v776 = vpop.permute.xlu0 %775
        %v778 = vsel %vm728, %v721, 0
        %v781 = vsel %vm728, %v776, 0
        %783 = vmatpush.bf16.xpose.msra.mxu0 0
        %784 = vmatpush.bf16.xpose.msra.mxu0 0
        %785 = vmatpush.bf16.xpose.msra.mxu0 0
        %786 = vmatpush.bf16.xpose.msra.mxu0 0
        %787 = vmatpush.bf16.xpose.msra.mxu0 0
        %788 = vmatpush.bf16.xpose.msra.mxu0 0
        %789 = vmatpush.bf16.xpose.msra.mxu0 0
        %790 = vmatpush.bf16.xpose.msra.mxu0 %v781
        %791 = vmatmul.bf16.gmra.mxu0 %v778
        %v792 = vpop.f32.mrf.mxu0
        %v793 = vadd.f32 0.0, %v792
        %v794 = vpop.f32.mrf.mxu0
        %795 = vdwg.mxu0
        %v797 = vunpack.c.l.b16 %v722
        %v798 = vpack.c.b16 %v797, %v797
        %799 = vrot.lane.b32.xlu0 %v798, 96
        %v800 = vpop.permute.xlu0 %799
        %v802 = vsel %vm728, %v722, 0
        %v805 = vsel %vm728, %v800, 0
        %807 = vmatpush.bf16.xpose.msra.mxu0 0
        %808 = vmatpush.bf16.xpose.msra.mxu0 0
        %809 = vmatpush.bf16.xpose.msra.mxu0 0
        %810 = vmatpush.bf16.xpose.msra.mxu0 0
        %811 = vmatpush.bf16.xpose.msra.mxu0 0
        %812 = vmatpush.bf16.xpose.msra.mxu0 0
        %813 = vmatpush.bf16.xpose.msra.mxu0 0
        %814 = vmatpush.bf16.xpose.msra.mxu0 %v805
        %815 = vmatmul.bf16.gmra.mxu0 %v802
        %v816 = vpop.f32.mrf.mxu0
        %v817 = vadd.f32 0.0, %v816
        %v818 = vpop.f32.mrf.mxu0
        %819 = vdwg.mxu0
        %v820 = vmul.f32 %v745, 0.35355338
        %v821 = vmul.f32 %v769, 0.35355338
        %v822 = vmul.f32 %v793, 0.35355338
        %v823 = vmul.f32 %v817, 0.35355338
        %v824 = vperm.slane %v673, 0
        %v825 = vadd.f32 %v820, %v824
        %v826 = vadd.f32 %v821, %v824
        %v827 = vadd.f32 %v822, %v824
        %v828 = vadd.f32 %v823, %v824
        %v829 = vsel %vm728, %v825, -inf
        %830 = vmax.xlane.f32.xlu0 %v829
        %v831 = vpop.xlane.xlu0 %830
        %v832 = vsel %vm728, %v826, -inf
        %833 = vmax.xlane.f32.xlu0 %v832
        %v834 = vpop.xlane.xlu0 %833
        %v835 = vsel %vm728, %v827, -inf
        %836 = vmax.xlane.f32.xlu0 %v835
        %v837 = vpop.xlane.xlu0 %836
        %v838 = vsel %vm728, %v828, -inf
        %839 = vmax.xlane.f32.xlu0 %v838
        %v840 = vpop.xlane.xlu0 %839
        %v841 = vsub.f32 %v825, %v831
        %v842 = vsub.f32 %v826, %v834
        %v843 = vsub.f32 %v827, %v837
        %v844 = vsub.f32 %v828, %v840
        %v845 = vmul.f32 %v841, 1.442695
        %v846 = vpow.pop %v845
        %v847 = vmul.f32 %v842, 1.442695
        %v848 = vpow.pop %v847
        %v849 = vmul.f32 %v843, 1.442695
        %v850 = vpow.pop %v849
        %v851 = vmul.f32 %v844, 1.442695
        %v852 = vpow.pop %v851
        %v853 = vsel %vm728, %v846, 0.0
        %854 = vadd.xlane.f32.xlu0 %v853
        %v855 = vpop.xlane.xlu0 %854
        %v856 = vsel %vm728, %v848, 0.0
        %857 = vadd.xlane.f32.xlu0 %v856
        %v858 = vpop.xlane.xlu0 %857
        %v859 = vsel %vm728, %v850, 0.0
        %860 = vadd.xlane.f32.xlu0 %v859
        %v861 = vpop.xlane.xlu0 %860
        %v862 = vsel %vm728, %v852, 0.0
        %863 = vadd.xlane.f32.xlu0 %v862
        %v864 = vpop.xlane.xlu0 %863
        %v865 = vrcp.pop %v855
        %v866 = vrcp.pop %v858
        %v867 = vrcp.pop %v861
        %v868 = vrcp.pop %v864
        %v869 = vmul.f32 %v846, %v865
        %v870 = vmul.f32 %v848, %v866
        %v871 = vmul.f32 %v850, %v867
        %v872 = vmul.f32 %v852, %v868
        %v873 = vpack.c.bf16 %v869, %v869
        %v874 = vpack.c.bf16 %v870, %v870
        %v875 = vpack.c.bf16 %v871, %v871
        %v876 = vpack.c.bf16 %v872, %v872
        %877 = vrot.lane.b32.xlu0 %v725, 64
        %v878 = vpop.permute.xlu0 %877
        %v880 = vsel %vm728, %v873, 0
        %vm882 = vcmask 1043456
        %v884 = vsel %vm882, %v878, 0
        %886 = vmatpush.bf16.msra.mxu0 0
        %887 = vmatpush.bf16.msra.mxu0 0
        %888 = vmatpush.bf16.msra.mxu0 0
        %889 = vmatpush.bf16.msra.mxu0 0
        %890 = vmatpush.bf16.msra.mxu0 0
        %891 = vmatpush.bf16.msra.mxu0 0
        %892 = vmatpush.bf16.msra.mxu0 0
        %893 = vmatpush.bf16.msra.mxu0 %v884
        %894 = vmatmul.bf16.gmra.mxu0 %v880
        %v895 = vpop.f32.mrf.mxu0
        %v896 = vadd.f32 0.0, %v895
        %v897 = vpop.f32.mrf.mxu0
        %898 = vdwg.mxu0
        %899 = vrot.lane.b32.xlu0 %v750, 64
        %v900 = vpop.permute.xlu0 %899
        %v902 = vsel %vm728, %v874, 0
        %v905 = vsel %vm882, %v900, 0
        %907 = vmatpush.bf16.msra.mxu0 0
        %908 = vmatpush.bf16.msra.mxu0 0
        %909 = vmatpush.bf16.msra.mxu0 0
        %910 = vmatpush.bf16.msra.mxu0 0
        %911 = vmatpush.bf16.msra.mxu0 0
        %912 = vmatpush.bf16.msra.mxu0 0
        %913 = vmatpush.bf16.msra.mxu0 0
        %914 = vmatpush.bf16.msra.mxu0 %v905
        %915 = vmatmul.bf16.gmra.mxu0 %v902
        %v916 = vpop.f32.mrf.mxu0
        %v917 = vadd.f32 0.0, %v916
        %v918 = vpop.f32.mrf.mxu0
        %919 = vdwg.mxu0
        %920 = vrot.lane.b32.xlu0 %v774, 64
        %v921 = vpop.permute.xlu0 %920
        %v923 = vsel %vm728, %v875, 0
        %v926 = vsel %vm882, %v921, 0
        %928 = vmatpush.bf16.msra.mxu0 0
        %929 = vmatpush.bf16.msra.mxu0 0
        %930 = vmatpush.bf16.msra.mxu0 0
        %931 = vmatpush.bf16.msra.mxu0 0
        %932 = vmatpush.bf16.msra.mxu0 0
        %933 = vmatpush.bf16.msra.mxu0 0
        %934 = vmatpush.bf16.msra.mxu0 0
        %935 = vmatpush.bf16.msra.mxu0 %v926
        %936 = vmatmul.bf16.gmra.mxu0 %v923
        %v937 = vpop.f32.mrf.mxu0
        %v938 = vadd.f32 0.0, %v937
        %v939 = vpop.f32.mrf.mxu0
        %940 = vdwg.mxu0
        %941 = vrot.lane.b32.xlu0 %v798, 64
        %v942 = vpop.permute.xlu0 %941
        %v944 = vsel %vm728, %v876, 0
        %v947 = vsel %vm882, %v942, 0
        %949 = vmatpush.bf16.msra.mxu0 0
        %950 = vmatpush.bf16.msra.mxu0 0
        %951 = vmatpush.bf16.msra.mxu0 0
        %952 = vmatpush.bf16.msra.mxu0 0
        %953 = vmatpush.bf16.msra.mxu0 0
        %954 = vmatpush.bf16.msra.mxu0 0
        %955 = vmatpush.bf16.msra.mxu0 0
        %956 = vmatpush.bf16.msra.mxu0 %v947
        %957 = vmatmul.bf16.gmra.mxu0 %v944
        %v958 = vpop.f32.mrf.mxu0
        %v959 = vadd.f32 0.0, %v958
        %v960 = vpop.f32.mrf.mxu0
        %961 = vdwg.mxu0
        %963 = vrot.lane.b32.xlu0 %v917, 8
        %v964 = vpop.permute.xlu0 %963
        %967 = vrot.lane.b32.xlu0 %v938, 16
        %v968 = vpop.permute.xlu0 %967
        %971 = vrot.lane.b32.xlu0 %v959, 24
        %v972 = vpop.permute.xlu0 %971
        %v974 = vsel %vm728, %v896, %v964
        %vm975 = vcmask 130048
        %v976 = vsel %vm975, %v974, %v968
        %vm977 = vcmask 195584
        %v978 = vsel %vm977, %v976, %v972
        %v979 = vpack.c.bf16 %v978, %v978
        %v980 = vld [vmem:[%s9] sm:$0xf]
        %v981 = vld [vmem:[%s9 + $0x4] sm:$0xf]
        %v982 = vld [vmem:[%s9 + $0x8] sm:$0xf]
        %v983 = vld [vmem:[%s9 + $0xc] sm:$0xf]
        %v984 = vld [vmem:[%s10] sm:$0x1]
        %v985 = vperm.slane %v984, 0
        %v990 = vunpack.c.l.b16 %v980
        %v991 = vunpack.c.l.b16 %v981
        %v992 = vunpack.c.l.b16 %v982
        %v993 = vunpack.c.l.b16 %v983
        %v994 = vpack.c.b16 %v991, %v990
        %v995 = vpack.c.b16 %v993, %v992
        %v999 = vsel %vm632, %v979, 0
        %1001 = vmatpush.bf16.msra.mxu0 0
        %1002 = vmatpush.bf16.msra.mxu0 0
        %1003 = vmatpush.bf16.msra.mxu0 0
        %1004 = vmatpush.bf16.msra.mxu0 0
        %1005 = vmatpush.bf16.msra.mxu0 0
        %1006 = vmatpush.bf16.msra.mxu0 0
        %1007 = vmatpush.bf16.msra.mxu0 %v995
        %1008 = vmatpush.bf16.msra.mxu0 %v994
        %1009 = vmatmul.bf16.gmra.mxu0 %v999
        %v1010 = vpop.f32.mrf.mxu0
        %v1011 = vadd.f32 %v985, %v1010
        %v1012 = vpop.f32.mrf.mxu0
        %1013 = vdwg.mxu0
        %v1014 = vadd.f32 %v669, %v1011
        %v1015 = vld [vmem:[%s11] sm:$0x1]
        %v1016 = vld [vmem:[%s12] sm:$0x1]
        %v1017 = vsel %vm632, %v1014, 0.0
        %1018 = vadd.xlane.f32.xlu0 %v1017
        %v1019 = vpop.xlane.xlu0 %1018
        %v1020 = vmul.f32 %v1019, %v642
        %v1021 = vsub.f32 %v1014, %v1020
        %v1022 = vmul.f32 %v1021, %v1021
        %v1023 = vsel %vm632, %v1022, 0.0
        %1024 = vadd.xlane.f32.xlu0 %v1023
        %v1025 = vpop.xlane.xlu0 %1024
        %v1026 = vmul.f32 %v1025, %v642
        %v1027 = vadd.f32 %v1026, 1e-12
        %v1028 = vrsqrt.pop %v1027
        %v1029 = vmul.f32 %v1028, %v1027
        %v1030 = vmul.f32 %v1029, %v1028
        %v1031 = vmul.f32 0.5, %v1030
        %v1032 = vsub.f32 1.5, %v1031
        %v1033 = vmul.f32 %v1028, %v1032
        %vm1034 = vweird.f32 %v1027
        %vm1035 = vweird.f32 %v1028
        %vm1036 = vmor %vm1034, %vm1035
        %v1037 = vsel %vm1036, %v1028, %v1033
        %v1038 = vmul.f32 %v1021, %v1037
        %v1039 = vperm.slane %v1015, 0
        %v1040 = vmul.f32 %v1038, %v1039
        %v1041 = vperm.slane %v1016, 0
        %v1042 = vadd.f32 %v1040, %v1041
        %v1043 = vpack.c.bf16 %v1042, %v1042
        %v1044 = vld [vmem:[%s13] sm:$0xf]
        %v1045 = vld [vmem:[%s13 + $0x4] sm:$0xf]
        %v1046 = vld [vmem:[%s13 + $0x8] sm:$0xf]
        %v1047 = vld [vmem:[%s13 + $0xc] sm:$0xf]
        %v1048 = vld [vmem:[%s14] sm:$0x1]
        %v1049 = vperm.slane %v1048, 0
        %v1054 = vunpack.c.l.b16 %v1044
        %v1055 = vunpack.c.l.b16 %v1045
        %v1056 = vunpack.c.l.b16 %v1046
        %v1057 = vunpack.c.l.b16 %v1047
        %v1058 = vpack.c.b16 %v1055, %v1054
        %v1059 = vpack.c.b16 %v1057, %v1056
        %v1063 = vsel %vm632, %v1043, 0
        %1065 = vmatpush.bf16.msra.mxu0 0
        %1066 = vmatpush.bf16.msra.mxu0 0
        %1067 = vmatpush.bf16.msra.mxu0 0
        %1068 = vmatpush.bf16.msra.mxu0 0
        %1069 = vmatpush.bf16.msra.mxu0 0
        %1070 = vmatpush.bf16.msra.mxu0 0
        %1071 = vmatpush.bf16.msra.mxu0 %v1059
        %1072 = vmatpush.bf16.msra.mxu0 %v1058
        %1073 = vmatmul.bf16.gmra.mxu0 %v1063
        %v1074 = vpop.f32.mrf.mxu0
        %v1075 = vadd.f32 %v1049, %v1074
        %v1076 = vpop.f32.mrf.mxu0
        %1077 = vdwg.mxu0
        %v1078 = vmul.f32 %v1075, 0.5
        %v1079 = vmul.f32 %v1075, 0.044715
        %v1080 = vmul.f32 %v1079, %v1075
        %v1081 = vmul.f32 %v1080, %v1075
        %v1082 = vadd.f32 %v1075, %v1081
        %v1083 = vmul.f32 %v1082, 0.7978846
        %v1084 = vtanh.pop %v1083
        %v1085 = vadd.f32 %v1084, 1.0
        %v1086 = vmul.f32 %v1078, %v1085
        %v1087 = vpack.c.bf16 %v1086, %v1086
        %v1088 = vld [vmem:[%s15] sm:$0xf]
        %v1089 = vld [vmem:[%s15 + $0x4] sm:$0xf]
        %v1090 = vld [vmem:[%s15 + $0x8] sm:$0xf]
        %v1091 = vld [vmem:[%s15 + $0xc] sm:$0xf]
        %v1092 = vld [vmem:[%s15 + $0x10] sm:$0xf]
        %v1093 = vld [vmem:[%s15 + $0x14] sm:$0xf]
        %v1094 = vld [vmem:[%s15 + $0x18] sm:$0xf]
        %v1095 = vld [vmem:[%s15 + $0x1c] sm:$0xf]
        %v1096 = vld [vmem:[%s16] sm:$0x1]
        %v1097 = vperm.slane %v1096, 0
        %v1106 = vunpack.c.l.b16 %v1088
        %v1107 = vunpack.c.l.b16 %v1089
        %v1108 = vunpack.c.l.b16 %v1090
        %v1109 = vunpack.c.l.b16 %v1091
        %v1110 = vunpack.c.l.b16 %v1092
        %v1111 = vunpack.c.l.b16 %v1093
        %v1112 = vunpack.c.l.b16 %v1094
        %v1113 = vunpack.c.l.b16 %v1095
        %v1114 = vpack.c.b16 %v1107, %v1106
        %v1115 = vpack.c.b16 %v1109, %v1108
        %v1116 = vpack.c.b16 %v1111, %v1110
        %v1117 = vpack.c.b16 %v1113, %v1112
        %vm1122 = vcmask 523264
        %v1124 = vsel %vm1122, %v1087, 0
        %1126 = vmatpush.bf16.msra.mxu0 0
        %1127 = vmatpush.bf16.msra.mxu0 0
        %1128 = vmatpush.bf16.msra.mxu0 0
        %1129 = vmatpush.bf16.msra.mxu0 0
        %1130 = vmatpush.bf16.msra.mxu0 %v1117
        %1131 = vmatpush.bf16.msra.mxu0 %v1116
        %1132 = vmatpush.bf16.msra.mxu0 %v1115
        %1133 = vmatpush.bf16.msra.mxu0 %v1114
        %1134 = vmatmul.bf16.gmra.mxu0 %v1124
        %v1135 = vpop.f32.mrf.mxu0
        %v1136 = vadd.f32 %v1097, %v1135
        %v1137 = vpop.f32.mrf.mxu0
        %1138 = vdwg.mxu0
        %v1139 = vadd.f32 %v1042, %v1136
        %v1140 = vld [vmem:[%s17] sm:$0x1]
        %v1141 = vld [vmem:[%s18] sm:$0x1]
        %v1142 = vsel %vm632, %v1139, 0.0
        %1143 = vadd.xlane.f32.xlu0 %v1142
        %v1144 = vpop.xlane.xlu0 %1143
        %v1145 = vmul.f32 %v1144, %v642
        %v1146 = vsub.f32 %v1139, %v1145
        %v1147 = vmul.f32 %v1146, %v1146
        %v1148 = vsel %vm632, %v1147, 0.0
        %1149 = vadd.xlane.f32.xlu0 %v1148
        %v1150 = vpop.xlane.xlu0 %1149
        %v1151 = vmul.f32 %v1150, %v642
        %v1152 = vadd.f32 %v1151, 1e-12
        %v1153 = vrsqrt.pop %v1152
        %v1154 = vmul.f32 %v1153, %v1152
        %v1155 = vmul.f32 %v1154, %v1153
        %v1156 = vmul.f32 0.5, %v1155
        %v1157 = vsub.f32 1.5, %v1156
        %v1158 = vmul.f32 %v1153, %v1157
        %vm1159 = vweird.f32 %v1152
        %vm1160 = vweird.f32 %v1153
        %vm1161 = vmor %vm1159, %vm1160
        %v1162 = vsel %vm1161, %v1153, %v1158
        %v1163 = vmul.f32 %v1146, %v1162
        %v1164 = vperm.slane %v1140, 0
        %v1165 = vmul.f32 %v1163, %v1164
        %v1166 = vperm.slane %v1141, 0
        %v1167 = vadd.f32 %v1165, %v1166
        %v1168 = vpack.c.bf16 %v1167, %v1167
        %s1169 = scalar_lea.vmem %s7, 16
        %v1170 = vld [vmem:[%s1169] sm:$0xf]
        %v1171 = vld [vmem:[%s1169 + $0x4] sm:$0xf]
        %v1172 = vld [vmem:[%s1169 + $0x8] sm:$0xf]
        %v1173 = vld [vmem:[%s1169 + $0xc] sm:$0xf]
        %v1174 = vld [vmem:[%s8 + $0x1] sm:$0x1]
        %v1175 = vperm.slane %v1174, 0
        %v1180 = vunpack.c.l.b16 %v1170
        %v1181 = vunpack.c.l.b16 %v1171
        %v1182 = vunpack.c.l.b16 %v1172
        %v1183 = vunpack.c.l.b16 %v1173
        %v1184 = vpack.c.b16 %v1181, %v1180
        %v1185 = vpack.c.b16 %v1183, %v1182
        %v1189 = vsel %vm632, %v1168, 0
        %1191 = vmatpush.bf16.msra.mxu0 0
        %1192 = vmatpush.bf16.msra.mxu0 0
        %1193 = vmatpush.bf16.msra.mxu0 0
        %1194 = vmatpush.bf16.msra.mxu0 0
        %1195 = vmatpush.bf16.msra.mxu0 0
        %1196 = vmatpush.bf16.msra.mxu0 0
        %1197 = vmatpush.bf16.msra.mxu0 %v1185
        %1198 = vmatpush.bf16.msra.mxu0 %v1184
        %1199 = vmatmul.bf16.gmra.mxu0 %v1189
        %v1200 = vpop.f32.mrf.mxu0
        %v1201 = vadd.f32 %v1175, %v1200
        %v1202 = vpop.f32.mrf.mxu0
        %1203 = vdwg.mxu0
        %1205 = vrot.lane.b32.xlu0 %v1201, 120
        %v1206 = vpop.permute.xlu0 %1205
        %1208 = vrot.lane.b32.xlu0 %v1201, 112
        %v1209 = vpop.permute.xlu0 %1208
        %1211 = vrot.lane.b32.xlu0 %v1201, 104
        %v1212 = vpop.permute.xlu0 %1211
        %v1214 = vpack.c.bf16 %v1201, %v1201
        %v1215 = vpack.c.bf16 %v1206, %v1206
        %v1216 = vpack.c.bf16 %v1209, %v1209
        %v1217 = vpack.c.bf16 %v1212, %v1212
        %v1219 = vunpack.c.l.b16 %v1214
        %v1220 = vpack.c.b16 %v1219, %v1219
        %1221 = vrot.lane.b32.xlu0 %v1220, 96
        %v1222 = vpop.permute.xlu0 %1221
        %v1224 = vsel %vm728, %v1214, 0
        %v1227 = vsel %vm728, %v1222, 0
        %1229 = vmatpush.bf16.xpose.msra.mxu0 0
        %1230 = vmatpush.bf16.xpose.msra.mxu0 0
        %1231 = vmatpush.bf16.xpose.msra.mxu0 0
        %1232 = vmatpush.bf16.xpose.msra.mxu0 0
        %1233 = vmatpush.bf16.xpose.msra.mxu0 0
        %1234 = vmatpush.bf16.xpose.msra.mxu0 0
        %1235 = vmatpush.bf16.xpose.msra.mxu0 0
        %1236 = vmatpush.bf16.xpose.msra.mxu0 %v1227
        %1237 = vmatmul.bf16.gmra.mxu0 %v1224
        %v1238 = vpop.f32.mrf.mxu0
        %v1239 = vadd.f32 0.0, %v1238
        %v1240 = vpop.f32.mrf.mxu0
        %1241 = vdwg.mxu0
        %v1243 = vunpack.c.l.b16 %v1215
        %v1244 = vpack.c.b16 %v1243, %v1243
        %1245 = vrot.lane.b32.xlu0 %v1244, 96
        %v1246 = vpop.permute.xlu0 %1245
        %v1248 = vsel %vm728, %v1215, 0
        %v1251 = vsel %vm728, %v1246, 0
        %1253 = vmatpush.bf16.xpose.msra.mxu0 0
        %1254 = vmatpush.bf16.xpose.msra.mxu0 0
        %1255 = vmatpush.bf16.xpose.msra.mxu0 0
        %1256 = vmatpush.bf16.xpose.msra.mxu0 0
        %1257 = vmatpush.bf16.xpose.msra.mxu0 0
        %1258 = vmatpush.bf16.xpose.msra.mxu0 0
        %1259 = vmatpush.bf16.xpose.msra.mxu0 0
        %1260 = vmatpush.bf16.xpose.msra.mxu0 %v1251
        %1261 = vmatmul.bf16.gmra.mxu0 %v1248
        %v1262 = vpop.f32.mrf.mxu0
        %v1263 = vadd.f32 0.0, %v1262
        %v1264 = vpop.f32.mrf.mxu0
        %1265 = vdwg.mxu0
        %v1267 = vunpack.c.l.b16 %v1216
        %v1268 = vpack.c.b16 %v1267, %v1267
        %1269 = vrot.lane.b32.xlu0 %v1268, 96
        %v1270 = vpop.permute.xlu0 %1269
        %v1272 = vsel %vm728, %v1216, 0
        %v1275 = vsel %vm728, %v1270, 0
        %1277 = vmatpush.bf16.xpose.msra.mxu0 0
        %1278 = vmatpush.bf16.xpose.msra.mxu0 0
        %1279 = vmatpush.bf16.xpose.msra.mxu0 0
        %1280 = vmatpush.bf16.xpose.msra.mxu0 0
        %1281 = vmatpush.bf16.xpose.msra.mxu0 0
        %1282 = vmatpush.bf16.xpose.msra.mxu0 0
        %1283 = vmatpush.bf16.xpose.msra.mxu0 0
        %1284 = vmatpush.bf16.xpose.msra.mxu0 %v1275
        %1285 = vmatmul.bf16.gmra.mxu0 %v1272
        %v1286 = vpop.f32.mrf.mxu0
        %v1287 = vadd.f32 0.0, %v1286
        %v1288 = vpop.f32.mrf.mxu0
        %1289 = vdwg.mxu0
        %v1291 = vunpack.c.l.b16 %v1217
        %v1292 = vpack.c.b16 %v1291, %v1291
        %1293 = vrot.lane.b32.xlu0 %v1292, 96
        %v1294 = vpop.permute.xlu0 %1293
        %v1296 = vsel %vm728, %v1217, 0
        %v1299 = vsel %vm728, %v1294, 0
        %1301 = vmatpush.bf16.xpose.msra.mxu0 0
        %1302 = vmatpush.bf16.xpose.msra.mxu0 0
        %1303 = vmatpush.bf16.xpose.msra.mxu0 0
        %1304 = vmatpush.bf16.xpose.msra.mxu0 0
        %1305 = vmatpush.bf16.xpose.msra.mxu0 0
        %1306 = vmatpush.bf16.xpose.msra.mxu0 0
        %1307 = vmatpush.bf16.xpose.msra.mxu0 0
        %1308 = vmatpush.bf16.xpose.msra.mxu0 %v1299
        %1309 = vmatmul.bf16.gmra.mxu0 %v1296
        %v1310 = vpop.f32.mrf.mxu0
        %v1311 = vadd.f32 0.0, %v1310
        %v1312 = vpop.f32.mrf.mxu0
        %1313 = vdwg.mxu0
        %v1314 = vmul.f32 %v1239, 0.35355338
        %v1315 = vmul.f32 %v1263, 0.35355338
        %v1316 = vmul.f32 %v1287, 0.35355338
        %v1317 = vmul.f32 %v1311, 0.35355338
        %v1318 = vadd.f32 %v1314, %v824
        %v1319 = vadd.f32 %v1315, %v824
        %v1320 = vadd.f32 %v1316, %v824
        %v1321 = vadd.f32 %v1317, %v824
        %v1322 = vsel %vm728, %v1318, -inf
        %1323 = vmax.xlane.f32.xlu0 %v1322
        %v1324 = vpop.xlane.xlu0 %1323
        %v1325 = vsel %vm728, %v1319, -inf
        %1326 = vmax.xlane.f32.xlu0 %v1325
        %v1327 = vpop.xlane.xlu0 %1326
        %v1328 = vsel %vm728, %v1320, -inf
        %1329 = vmax.xlane.f32.xlu0 %v1328
        %v1330 = vpop.xlane.xlu0 %1329
        %v1331 = vsel %vm728, %v1321, -inf
        %1332 = vmax.xlane.f32.xlu0 %v1331
        %v1333 = vpop.xlane.xlu0 %1332
        %v1334 = vsub.f32 %v1318, %v1324
        %v1335 = vsub.f32 %v1319, %v1327
        %v1336 = vsub.f32 %v1320, %v1330
        %v1337 = vsub.f32 %v1321, %v1333
        %v1338 = vmul.f32 %v1334, 1.442695
        %v1339 = vpow.pop %v1338
        %v1340 = vmul.f32 %v1335, 1.442695
        %v1341 = vpow.pop %v1340
        %v1342 = vmul.f32 %v1336, 1.442695
        %v1343 = vpow.pop %v1342
        %v1344 = vmul.f32 %v1337, 1.442695
        %v1345 = vpow.pop %v1344
        %v1346 = vsel %vm728, %v1339, 0.0
        %1347 = vadd.xlane.f32.xlu0 %v1346
        %v1348 = vpop.xlane.xlu0 %1347
        %v1349 = vsel %vm728, %v1341, 0.0
        %1350 = vadd.xlane.f32.xlu0 %v1349
        %v1351 = vpop.xlane.xlu0 %1350
        %v1352 = vsel %vm728, %v1343, 0.0
        %1353 = vadd.xlane.f32.xlu0 %v1352
        %v1354 = vpop.xlane.xlu0 %1353
        %v1355 = vsel %vm728, %v1345, 0.0
        %1356 = vadd.xlane.f32.xlu0 %v1355
        %v1357 = vpop.xlane.xlu0 %1356
        %v1358 = vrcp.pop %v1348
        %v1359 = vrcp.pop %v1351
        %v1360 = vrcp.pop %v1354
        %v1361 = vrcp.pop %v1357
        %v1362 = vmul.f32 %v1339, %v1358
        %v1363 = vmul.f32 %v1341, %v1359
        %v1364 = vmul.f32 %v1343, %v1360
        %v1365 = vmul.f32 %v1345, %v1361
        %v1366 = vpack.c.bf16 %v1362, %v1362
        %v1367 = vpack.c.bf16 %v1363, %v1363
        %v1368 = vpack.c.bf16 %v1364, %v1364
        %v1369 = vpack.c.bf16 %v1365, %v1365
        %1370 = vrot.lane.b32.xlu0 %v1220, 64
        %v1371 = vpop.permute.xlu0 %1370
        %v1373 = vsel %vm728, %v1366, 0
        %v1376 = vsel %vm882, %v1371, 0
        %1378 = vmatpush.bf16.msra.mxu0 0
        %1379 = vmatpush.bf16.msra.mxu0 0
        %1380 = vmatpush.bf16.msra.mxu0 0
        %1381 = vmatpush.bf16.msra.mxu0 0
        %1382 = vmatpush.bf16.msra.mxu0 0
        %1383 = vmatpush.bf16.msra.mxu0 0
        %1384 = vmatpush.bf16.msra.mxu0 0
        %1385 = vmatpush.bf16.msra.mxu0 %v1376
        %1386 = vmatmul.bf16.gmra.mxu0 %v1373
        %v1387 = vpop.f32.mrf.mxu0
        %v1388 = vadd.f32 0.0, %v1387
        %v1389 = vpop.f32.mrf.mxu0
        %1390 = vdwg.mxu0
        %1391 = vrot.lane.b32.xlu0 %v1244, 64
        %v1392 = vpop.permute.xlu0 %1391
        %v1394 = vsel %vm728, %v1367, 0
        %v1397 = vsel %vm882, %v1392, 0
        %1399 = vmatpush.bf16.msra.mxu0 0
        %1400 = vmatpush.bf16.msra.mxu0 0
        %1401 = vmatpush.bf16.msra.mxu0 0
        %1402 = vmatpush.bf16.msra.mxu0 0
        %1403 = vmatpush.bf16.msra.mxu0 0
        %1404 = vmatpush.bf16.msra.mxu0 0
        %1405 = vmatpush.bf16.msra.mxu0 0
        %1406 = vmatpush.bf16.msra.mxu0 %v1397
        %1407 = vmatmul.bf16.gmra.mxu0 %v1394
        %v1408 = vpop.f32.mrf.mxu0
        %v1409 = vadd.f32 0.0, %v1408
        %v1410 = vpop.f32.mrf.mxu0
        %1411 = vdwg.mxu0
        %1412 = vrot.lane.b32.xlu0 %v1268, 64
        %v1413 = vpop.permute.xlu0 %1412
        %v1415 = vsel %vm728, %v1368, 0
        %v1418 = vsel %vm882, %v1413, 0
        %1420 = vmatpush.bf16.msra.mxu0 0
        %1421 = vmatpush.bf16.msra.mxu0 0
        %1422 = vmatpush.bf16.msra.mxu0 0
        %1423 = vmatpush.bf16.msra.mxu0 0
        %1424 = vmatpush.bf16.msra.mxu0 0
        %1425 = vmatpush.bf16.msra.mxu0 0
        %1426 = vmatpush.bf16.msra.mxu0 0
        %1427 = vmatpush.bf16.msra.mxu0 %v1418
        %1428 = vmatmul.bf16.gmra.mxu0 %v1415
        %v1429 = vpop.f32.mrf.mxu0
        %v1430 = vadd.f32 0.0, %v1429
        %v1431 = vpop.f32.mrf.mxu0
        %1432 = vdwg.mxu0
        %1433 = vrot.lane.b32.xlu0 %v1292, 64
        %v1434 = vpop.permute.xlu0 %1433
        %v1436 = vsel %vm728, %v1369, 0
        %v1439 = vsel %vm882, %v1434, 0
        %1441 = vmatpush.bf16.msra.mxu0 0
        %1442 = vmatpush.bf16.msra.mxu0 0
        %1443 = vmatpush.bf16.msra.mxu0 0
        %1444 = vmatpush.bf16.msra.mxu0 0
        %1445 = vmatpush.bf16.msra.mxu0 0
        %1446 = vmatpush.bf16.msra.mxu0 0
        %1447 = vmatpush.bf16.msra.mxu0 0
        %1448 = vmatpush.bf16.msra.mxu0 %v1439
        %1449 = vmatmul.bf16.gmra.mxu0 %v1436
        %v1450 = vpop.f32.mrf.mxu0
        %v1451 = vadd.f32 0.0, %v1450
        %v1452 = vpop.f32.mrf.mxu0
        %1453 = vdwg.mxu0
        %1455 = vrot.lane.b32.xlu0 %v1409, 8
        %v1456 = vpop.permute.xlu0 %1455
        %1459 = vrot.lane.b32.xlu0 %v1430, 16
        %v1460 = vpop.permute.xlu0 %1459
        %1463 = vrot.lane.b32.xlu0 %v1451, 24
        %v1464 = vpop.permute.xlu0 %1463
        %v1466 = vsel %vm728, %v1388, %v1456
        %v1467 = vsel %vm975, %v1466, %v1460
        %v1468 = vsel %vm977, %v1467, %v1464
        %v1469 = vpack.c.bf16 %v1468, %v1468
        %s1470 = scalar_lea.vmem %s9, 16
        %v1471 = vld [vmem:[%s1470] sm:$0xf]
        %v1472 = vld [vmem:[%s1470 + $0x4] sm:$0xf]
        %v1473 = vld [vmem:[%s1470 + $0x8] sm:$0xf]
        %v1474 = vld [vmem:[%s1470 + $0xc] sm:$0xf]
        %v1475 = vld [vmem:[%s10 + $0x1] sm:$0x1]
        %v1476 = vperm.slane %v1475, 0
        %v1481 = vunpack.c.l.b16 %v1471
        %v1482 = vunpack.c.l.b16 %v1472
        %v1483 = vunpack.c.l.b16 %v1473
        %v1484 = vunpack.c.l.b16 %v1474
        %v1485 = vpack.c.b16 %v1482, %v1481
        %v1486 = vpack.c.b16 %v1484, %v1483
        %v1490 = vsel %vm632, %v1469, 0
        %1492 = vmatpush.bf16.msra.mxu0 0
        %1493 = vmatpush.bf16.msra.mxu0 0
        %1494 = vmatpush.bf16.msra.mxu0 0
        %1495 = vmatpush.bf16.msra.mxu0 0
        %1496 = vmatpush.bf16.msra.mxu0 0
        %1497 = vmatpush.bf16.msra.mxu0 0
        %1498 = vmatpush.bf16.msra.mxu0 %v1486
        %1499 = vmatpush.bf16.msra.mxu0 %v1485
        %1500 = vmatmul.bf16.gmra.mxu0 %v1490
        %v1501 = vpop.f32.mrf.mxu0
        %v1502 = vadd.f32 %v1476, %v1501
        %v1503 = vpop.f32.mrf.mxu0
        %1504 = vdwg.mxu0
        %v1505 = vadd.f32 %v1167, %v1502
        %v1506 = vld [vmem:[%s11 + $0x1] sm:$0x1]
        %v1507 = vld [vmem:[%s12 + $0x1] sm:$0x1]
        %v1508 = vsel %vm632, %v1505, 0.0
        %1509 = vadd.xlane.f32.xlu0 %v1508
        %v1510 = vpop.xlane.xlu0 %1509
        %v1511 = vmul.f32 %v1510, %v642
        %v1512 = vsub.f32 %v1505, %v1511
        %v1513 = vmul.f32 %v1512, %v1512
        %v1514 = vsel %vm632, %v1513, 0.0
        %1515 = vadd.xlane.f32.xlu0 %v1514
        %v1516 = vpop.xlane.xlu0 %1515
        %v1517 = vmul.f32 %v1516, %v642
        %v1518 = vadd.f32 %v1517, 1e-12
        %v1519 = vrsqrt.pop %v1518
        %v1520 = vmul.f32 %v1519, %v1518
        %v1521 = vmul.f32 %v1520, %v1519
        %v1522 = vmul.f32 0.5, %v1521
        %v1523 = vsub.f32 1.5, %v1522
        %v1524 = vmul.f32 %v1519, %v1523
        %vm1525 = vweird.f32 %v1518
        %vm1526 = vweird.f32 %v1519
        %vm1527 = vmor %vm1525, %vm1526
        %v1528 = vsel %vm1527, %v1519, %v1524
        %v1529 = vmul.f32 %v1512, %v1528
        %v1530 = vperm.slane %v1506, 0
        %v1531 = vmul.f32 %v1529, %v1530
        %v1532 = vperm.slane %v1507, 0
        %v1533 = vadd.f32 %v1531, %v1532
        %v1534 = vpack.c.bf16 %v1533, %v1533
        %s1535 = scalar_lea.vmem %s13, 16
        %v1536 = vld [vmem:[%s1535] sm:$0xf]
        %v1537 = vld [vmem:[%s1535 + $0x4] sm:$0xf]
        %v1538 = vld [vmem:[%s1535 + $0x8] sm:$0xf]
        %v1539 = vld [vmem:[%s1535 + $0xc] sm:$0xf]
        %v1540 = vld [vmem:[%s14 + $0x1] sm:$0x1]
        %v1541 = vperm.slane %v1540, 0
        %v1546 = vunpack.c.l.b16 %v1536
        %v1547 = vunpack.c.l.b16 %v1537
        %v1548 = vunpack.c.l.b16 %v1538
        %v1549 = vunpack.c.l.b16 %v1539
        %v1550 = vpack.c.b16 %v1547, %v1546
        %v1551 = vpack.c.b16 %v1549, %v1548
        %v1555 = vsel %vm632, %v1534, 0
        %1557 = vmatpush.bf16.msra.mxu0 0
        %1558 = vmatpush.bf16.msra.mxu0 0
        %1559 = vmatpush.bf16.msra.mxu0 0
        %1560 = vmatpush.bf16.msra.mxu0 0
        %1561 = vmatpush.bf16.msra.mxu0 0
        %1562 = vmatpush.bf16.msra.mxu0 0
        %1563 = vmatpush.bf16.msra.mxu0 %v1551
        %1564 = vmatpush.bf16.msra.mxu0 %v1550
        %1565 = vmatmul.bf16.gmra.mxu0 %v1555
        %v1566 = vpop.f32.mrf.mxu0
        %v1567 = vadd.f32 %v1541, %v1566
        %v1568 = vpop.f32.mrf.mxu0
        %1569 = vdwg.mxu0
        %v1570 = vmul.f32 %v1567, 0.5
        %v1571 = vmul.f32 %v1567, 0.044715
        %v1572 = vmul.f32 %v1571, %v1567
        %v1573 = vmul.f32 %v1572, %v1567
        %v1574 = vadd.f32 %v1567, %v1573
        %v1575 = vmul.f32 %v1574, 0.7978846
        %v1576 = vtanh.pop %v1575
        %v1577 = vadd.f32 %v1576, 1.0
        %v1578 = vmul.f32 %v1570, %v1577
        %v1579 = vpack.c.bf16 %v1578, %v1578
        %s1580 = scalar_lea.vmem %s15, 32
        %v1581 = vld [vmem:[%s1580] sm:$0xf]
        %v1582 = vld [vmem:[%s1580 + $0x4] sm:$0xf]
        %v1583 = vld [vmem:[%s1580 + $0x8] sm:$0xf]
        %v1584 = vld [vmem:[%s1580 + $0xc] sm:$0xf]
        %v1585 = vld [vmem:[%s1580 + $0x10] sm:$0xf]
        %v1586 = vld [vmem:[%s1580 + $0x14] sm:$0xf]
        %v1587 = vld [vmem:[%s1580 + $0x18] sm:$0xf]
        %v1588 = vld [vmem:[%s1580 + $0x1c] sm:$0xf]
        %v1589 = vld [vmem:[%s16 + $0x1] sm:$0x1]
        %v1590 = vperm.slane %v1589, 0
        %v1599 = vunpack.c.l.b16 %v1581
        %v1600 = vunpack.c.l.b16 %v1582
        %v1601 = vunpack.c.l.b16 %v1583
        %v1602 = vunpack.c.l.b16 %v1584
        %v1603 = vunpack.c.l.b16 %v1585
        %v1604 = vunpack.c.l.b16 %v1586
        %v1605 = vunpack.c.l.b16 %v1587
        %v1606 = vunpack.c.l.b16 %v1588
        %v1607 = vpack.c.b16 %v1600, %v1599
        %v1608 = vpack.c.b16 %v1602, %v1601
        %v1609 = vpack.c.b16 %v1604, %v1603
        %v1610 = vpack.c.b16 %v1606, %v1605
        %v1616 = vsel %vm1122, %v1579, 0
        %1618 = vmatpush.bf16.msra.mxu0 0
        %1619 = vmatpush.bf16.msra.mxu0 0
        %1620 = vmatpush.bf16.msra.mxu0 0
        %1621 = vmatpush.bf16.msra.mxu0 0
        %1622 = vmatpush.bf16.msra.mxu0 %v1610
        %1623 = vmatpush.bf16.msra.mxu0 %v1609
        %1624 = vmatpush.bf16.msra.mxu0 %v1608
        %1625 = vmatpush.bf16.msra.mxu0 %v1607
        %1626 = vmatmul.bf16.gmra.mxu0 %v1616
        %v1627 = vpop.f32.mrf.mxu0
        %v1628 = vadd.f32 %v1590, %v1627
        %v1629 = vpop.f32.mrf.mxu0
        %1630 = vdwg.mxu0
        %v1631 = vadd.f32 %v1533, %v1628
        %v1632 = vld [vmem:[%s17 + $0x1] sm:$0x1]
        %v1633 = vld [vmem:[%s18 + $0x1] sm:$0x1]
        %v1634 = vsel %vm632, %v1631, 0.0
        %1635 = vadd.xlane.f32.xlu0 %v1634
        %v1636 = vpop.xlane.xlu0 %1635
        %v1637 = vmul.f32 %v1636, %v642
        %v1638 = vsub.f32 %v1631, %v1637
        %v1639 = vmul.f32 %v1638, %v1638
        %v1640 = vsel %vm632, %v1639, 0.0
        %1641 = vadd.xlane.f32.xlu0 %v1640
        %v1642 = vpop.xlane.xlu0 %1641
        %v1643 = vmul.f32 %v1642, %v642
        %v1644 = vadd.f32 %v1643, 1e-12
        %v1645 = vrsqrt.pop %v1644
        %v1646 = vmul.f32 %v1645, %v1644
        %v1647 = vmul.f32 %v1646, %v1645
        %v1648 = vmul.f32 0.5, %v1647
        %v1649 = vsub.f32 1.5, %v1648
        %v1650 = vmul.f32 %v1645, %v1649
        %vm1651 = vweird.f32 %v1644
        %vm1652 = vweird.f32 %v1645
        %vm1653 = vmor %vm1651, %vm1652
        %v1654 = vsel %vm1653, %v1645, %v1650
        %v1655 = vmul.f32 %v1638, %v1654
        %v1656 = vperm.slane %v1632, 0
        %v1657 = vmul.f32 %v1655, %v1656
        %v1658 = vperm.slane %v1633, 0
        %v1659 = vadd.f32 %v1657, %v1658
        %1660 = vst.msk [vmem:[%s561] sm:$0x1] %vm571, %v1659
        %s1661 = sand.u32 %s427, 1
        %s1662 = scalar_lea.sflag [#allocation6], %s1661
        %s1663 = sand.u32 %s427, 1
        %s1664 = scalar_lea.vmem [#allocation5], %s1663
        // Predicated region
        $region93: #{single_sentence_encoder_bert.1} parent=91 // pred_check
          %p1665 = pneg %p437
        $region94: #{single_sentence_encoder_bert.1} parent=91 // pred_check_branch
          %1667 = sbr.rel (%p1665) target = $region96
        $region95: #{single_sentence_encoder_bert.1} parent=91 // pred_region
          %1669 = vsyncadd %s1662, 0
          %s1670 = scalar_lea.hbm %s19, %s41
          %s1672 = sshll.u32 %s1664, 4
          %s1673 = int_to_ptr.vmem [resolvable:$true] %s1672
          %s1674 = sshll.u32 %s1670, 4
          %s1675 = int_to_ptr.hbm [resolvable:$true] %s1674
          %1677 = dma.vmem_to_hbm [thread:$0]  %s1673, 16, %s1675, %s1662
        $region96: #{single_sentence_encoder_bert.1} parent=91 // pred_fallthru
          _
      $region92: #{single_sentence_encoder_bert.1} parent=5 // pred_fallthru
        _
      %p1678 = scmp.le.s32.totalorder 2, %s36
      // Predicated region
      $region97: #{single_sentence_encoder_bert.1} parent=5 // pred_check
        %p1679 = pneg %p1678
      $region98: #{single_sentence_encoder_bert.1} parent=5 // pred_check_branch
        %1681 = sbr.rel (%p1679) target = $region100
      $region99: #{single_sentence_encoder_bert.1} parent=5 // pred_region
        %s1682 = ssub.s32 %s36, 2
        // Predicated region
        $region101: #{single_sentence_encoder_bert.1} parent=99 // pred_check
          %p1683 = pneg %p443
        $region102: #{single_sentence_encoder_bert.1} parent=99 // pred_check_branch
          %1685 = sbr.rel (%p1683) target = $region104
        $region103: #{single_sentence_encoder_bert.1} parent=99 // pred_region
          %s1686 = sand.u32 %s428, 1
          %s1687 = scalar_lea.sflag [#allocation6], %s1686
          %s1688 = sand.u32 %s428, 1
          %s1689 = scalar_lea.vmem [#allocation5], %s1688
          %1691 = dma.done %s1687, 16
        $region104: #{single_sentence_encoder_bert.1} parent=99 // pred_fallthru
          _
      $region100: #{single_sentence_encoder_bert.1} parent=5 // pred_fallthru
        _
    $region6: #{single_sentence_encoder_bert.1} parent=1 // loop_footer
      %s40 = sadd.s32 1, %s36
    $region7: #{single_sentence_encoder_bert.1} parent=1 // loop_footer_branch
      %35 = sbr.rel target = $region3
    $region8: #{single_sentence_encoder_bert.1} parent=1 // loop_exit
      _
    %1692 = vsyncpa [#allocation6], 1
    %s1693 = scalar_lea.sflag [#allocation6], 1
    %1694 = vsyncpa %s1693, 1

</llo_original>
